<compile_context>
chip_gen: v6e
topology: v6e:2x2x1
jax: 0.10.0
libtpu: 0.0.40
codegen_flags: <defaults>
</compile_context>

<pallas_src>
import math

import jax
import jax.numpy as jnp
from jax.experimental import pallas as pl
from jax.experimental.pallas import tpu as pltpu

F_PAD = 128          # lane-padded feature width
F2_PAD = 2 * F_PAD   # fused [fx | agg] width (K=256, MXU-native on v6e/v7x)


def _round_up(v, m):
    return ((v + m - 1) // m) * m


# ----------------------------------------------------------------------------
# Fused ForceGNN kernel: grid axis = layer, persistent VMEM state for h.
# ----------------------------------------------------------------------------
def force_gnn_kernel(x_ref, g_ref, s_ref,                    # resident inputs
                     w1_ref, b1_ref, w2_ref, b2_ref,         # resident weight
                     w3_ref, b3_ref, w4_ref, b4_ref,         #   slabs (all layers)
                     out_ref,                                 # (n_pad, 128) f32
                     h_ref, cat_ref):                         # VMEM scratch
    layer = pl.program_id(0)
    n_layers = pl.num_programs(0)

    # Layer 0: seed the persistent node state with the (padded) input features.
    @pl.when(layer == 0)
    def _():
        h_ref[...] = x_ref[...]

    h = h_ref[...]
    h_bf = h.astype(jnp.bfloat16)

    # ---- gather x_input[row] as ONE one-hot MXU matmul: xg = G @ h ----------
    xg = jnp.dot(g_ref[...], h_bf, preferred_element_type=jnp.float32)

    # ---- message MLP: Linear -> ReLU -> Linear (bf16 MXU, f32 accumulate) ----
    h1 = jnp.maximum(
        jnp.dot(xg.astype(jnp.bfloat16), w1_ref[layer],
                preferred_element_type=jnp.float32) + b1_ref[layer],
        0.0)
    msg = (jnp.dot(h1.astype(jnp.bfloat16), w2_ref[layer],
                   preferred_element_type=jnp.float32) + b2_ref[layer])

    # ---- scatter-add over col as ONE one-hot MXU matmul: agg = S @ msg ------
    # Padded edge columns of S are zero, so bias-only garbage rows of msg
    # (edge slots >= num_edges) contribute nothing.
    agg = jnp.dot(s_ref[...], msg.astype(jnp.bfloat16),
                  preferred_element_type=jnp.float32)

    # ---- output MLP on cat([fx, agg]) as ONE K=256 dot ----------------------
    cat_ref[:, :F_PAD] = h_bf
    cat_ref[:, F_PAD:] = agg.astype(jnp.bfloat16)
    h2 = jnp.maximum(
        jnp.dot(cat_ref[...], w3_ref[layer],
                preferred_element_type=jnp.float32) + b3_ref[layer],
        0.0)
    out = (jnp.dot(h2.astype(jnp.bfloat16), w4_ref[layer],
                   preferred_element_type=jnp.float32) + b4_ref[layer])

    # ---- layer bookkeeping: h = out (layer 0), h += out (middle, residual),
    #      final layer writes the lane-dense output block.
    @pl.when(layer == 0)
    def _():
        h_ref[...] = out

    @pl.when(jnp.logical_and(layer > 0, layer < n_layers - 1))
    def _():
        h_ref[...] = out + h_ref[...]

    @pl.when(layer == n_layers - 1)
    def _():
        out_ref[...] = out


# ----------------------------------------------------------------------------
# Parameters (PyTorch nn.Linear-style uniform init), padding & stacking.
# ----------------------------------------------------------------------------
def _linear_params(key, fan_in, fan_out):
    bound = 1.0 / math.sqrt(fan_in)
    kw, kb = jax.random.split(key)
    w = jax.random.uniform(kw, (fan_in, fan_out), jnp.float32, -bound, bound)
    b = jax.random.uniform(kb, (1, fan_out), jnp.float32, -bound, bound)
    return w, b


def make_node_model_params(key, in_feat, out_feat):
    k1, k2, k3, k4 = jax.random.split(key, 4)
    w1, b1 = _linear_params(k1, in_feat, in_feat)       # message MLP layer 1
    w2, b2 = _linear_params(k2, in_feat, in_feat)       # message MLP layer 2
    w3, b3 = _linear_params(k3, 2 * in_feat, in_feat)   # output MLP layer 1
    w4, b4 = _linear_params(k4, in_feat, out_feat)      # output MLP layer 2
    return {"w1": w1, "b1": b1, "w2": w2, "b2": b2,
            "w3": w3, "b3": b3, "w4": w4, "b4": b4}


def make_force_gnn_params(key, in_feat, hidden_dim, out_feat, num_layers):
    dims = ([(in_feat, hidden_dim)]
            + [(hidden_dim, hidden_dim)] * (num_layers - 2)
            + [(hidden_dim, out_feat)])
    keys = jax.random.split(key, num_layers)
    return [make_node_model_params(k, fi, fo) for k, (fi, fo) in zip(keys, dims)]


def _pad_to(a, rows, cols):
    out = jnp.zeros((rows, cols), a.dtype)
    return out.at[:a.shape[0], :a.shape[1]].set(a)


def _pack_params(layer_params):
    """Zero-pad to 128 lanes, fuse W3 into a (256,128) slab, stack over layers."""
    def stack_w(name):
        return jnp.stack([_pad_to(p[name], F_PAD, F_PAD)
                          for p in layer_params]).astype(jnp.bfloat16)

    def pad_w3(p):
        in_feat = p["w1"].shape[0]
        o = p["w3"].shape[1]
        w3 = jnp.zeros((F2_PAD, F_PAD), jnp.float32)
        w3 = w3.at[:in_feat, :o].set(p["w3"][:in_feat])          # fx half
        w3 = w3.at[F_PAD:F_PAD + in_feat, :o].set(p["w3"][in_feat:])  # agg half
        return w3

    def stack_b(name):  # biases stay f32, zero-padded lanes (no pollution)
        return jnp.stack([_pad_to(p[name], 1, F_PAD) for p in layer_params])

    return dict(W1=stack_w("w1"), B1=stack_b("b1"),
                W2=stack_w("w2"), B2=stack_b("b2"),
                W3=jnp.stack([pad_w3(p) for p in layer_params]).astype(jnp.bfloat16),
                B3=stack_b("b3"),
                W4=stack_w("w4"), B4=stack_b("b4"))


def _vmem_limit_bytes(n_pad, e_pad, n_layers):
    f32, bf16 = 4, 2
    resident_io = (2 * n_pad * F_PAD * f32          # x, out
                   + 2 * e_pad * n_pad * bf16)      # G, S
    weights = n_layers * ((3 * F_PAD * F_PAD + F2_PAD * F_PAD) * bf16
                          + 4 * 8 * F_PAD * f32)    # biases pad to 8 sublanes
    scratch = n_pad * F_PAD * f32 + n_pad * F2_PAD * bf16
    est = 2 * (resident_io + weights) + scratch     # x2: pipeline buffering
    # Cap below v7x's 64 MiB physical VMEM; floor keeps v5e above its 16 MiB default.
    return int(min(max(est + (4 << 20), 32 << 20), 56 << 20))


# ----------------------------------------------------------------------------
# ForceGNN forward (all layers in one pallas_call).
# ----------------------------------------------------------------------------
def force_gnn_forward(params, x, edge_index, batch, num_graphs, init_coords=None):
    del batch  # grouping is static via num_graphs (no device->host sync)
    x_in = (jnp.concatenate([x, init_coords], axis=1)
            if init_coords is not None else x)
    n_nodes, f_in = x_in.shape
    n_layers = len(params)
    n_edges = edge_index.shape[1]
    out_feat = params[-1]["w4"].shape[1]

    n_pad = _round_up(n_nodes, 128)
    e_pad = _round_up(n_edges, 128)

    x_p = jnp.zeros((n_pad, F_PAD), jnp.float32)
    x_p = x_p.at[:n_nodes, :f_in].set(x_in.astype(jnp.float32))

    # One-hot gather / scatter matrices (layer-independent, built once; padded
    # edge slots use index -1 so their rows/columns are all-zero).
    row = edge_index[0].astype(jnp.int32)
    col = edge_index[1].astype(jnp.int32)
    row_p = jnp.full((e_pad,), -1, jnp.int32).at[:n_edges].set(row)
    col_p = jnp.full((e_pad,), -1, jnp.int32).at[:n_edges].set(col)
    node_ids = jnp.arange(n_pad, dtype=jnp.int32)
    g_mat = (row_p[:, None] == node_ids[None, :]).astype(jnp.bfloat16)  # (E,N)
    s_mat = (node_ids[:, None] == col_p[None, :]).astype(jnp.bfloat16)  # (N,E)

    pk = _pack_params(params)

    resident2 = lambda l: (0, 0)       # fetched once, resident across layers
    resident3 = lambda l: (0, 0, 0)    # whole weight stack resident

    grid_spec = pltpu.PrefetchScalarGridSpec(
        num_scalar_prefetch=0,
        grid=(n_layers,),
        in_specs=[
            pl.BlockSpec((n_pad, F_PAD), resident2),             # x (padded)
            pl.BlockSpec((e_pad, n_pad), resident2),             # G (gather)
            pl.BlockSpec((n_pad, e_pad), resident2),             # S (scatter)
            pl.BlockSpec((n_layers, F_PAD, F_PAD), resident3),   # W1
            pl.BlockSpec((n_layers, 1, F_PAD), resident3),       # B1
            pl.BlockSpec((n_layers, F_PAD, F_PAD), resident3),   # W2
            pl.BlockSpec((n_layers, 1, F_PAD), resident3),       # B2
            pl.BlockSpec((n_layers, F2_PAD, F_PAD), resident3),  # W3 (fused K=256)
            pl.BlockSpec((n_layers, 1, F_PAD), resident3),       # B3
            pl.BlockSpec((n_layers, F_PAD, F_PAD), resident3),   # W4
            pl.BlockSpec((n_layers, 1, F_PAD), resident3),       # B4
        ],
        out_specs=pl.BlockSpec((n_pad, F_PAD), resident2),
        scratch_shapes=[
            pltpu.VMEM((n_pad, F_PAD), jnp.float32),    # h (persistent state)
            pltpu.VMEM((n_pad, F2_PAD), jnp.bfloat16),  # [fx | agg] concat operand
        ],
    )

    out_padded = pl.pallas_call(
        force_gnn_kernel,
        out_shape=jax.ShapeDtypeStruct((n_pad, F_PAD), jnp.float32),
        grid_spec=grid_spec,
        compiler_params=pltpu.CompilerParams(
            dimension_semantics=("arbitrary",),           # sequential layer chain
            vmem_limit_bytes=_vmem_limit_bytes(n_pad, e_pad, n_layers)),
    )(x_p, g_mat, s_mat,
      pk["W1"], pk["B1"], pk["W2"], pk["B2"],
      pk["W3"], pk["B3"], pk["W4"], pk["B4"])

    coords = out_padded[:n_nodes, :out_feat]
    nodes_per_graph = n_nodes // num_graphs
    return coords.reshape(num_graphs, nodes_per_graph, out_feat)


# ----------------------------------------------------------------------------
# Pure-JAX reference (same bf16 rounding points) for a correctness check.
# ----------------------------------------------------------------------------
def _ref_forward(params, x, edge_index, num_graphs):
    row, col = edge_index[0], edge_index[1]
    n = x.shape[0]

    def dot_bf16(a, w):
        return jnp.dot(a.astype(jnp.bfloat16), w.astype(jnp.bfloat16),
                       preferred_element_type=jnp.float32)

    def layer(p, h):
        xg = h[row]
        h1 = jnp.maximum(dot_bf16(xg, p["w1"]) + p["b1"], 0.0)
        msg = dot_bf16(h1, p["w2"]) + p["b2"]
        # match kernel rounding: messages enter the scatter matmul as bf16
        msg_b = msg.astype(jnp.bfloat16).astype(jnp.float32)
        agg = jnp.zeros((n, msg.shape[1]), jnp.float32).at[col].add(msg_b)
        cat = jnp.concatenate([h, agg], axis=1)
        h2 = jnp.maximum(dot_bf16(cat, p["w3"]) + p["b3"], 0.0)
        return dot_bf16(h2, p["w4"]) + p["b4"]

    h = layer(params[0], x)
    for i in range(1, len(params) - 1):
        h = layer(params[i], h) + h
    coords = layer(params[-1], h)
    return coords.reshape(num_graphs, n // num_graphs, coords.shape[-1])


# ----------------------------------------------------------------------------
# Main
# ----------------------------------------------------------------------------
if __name__ == "__main__":
    in_feat, hidden_dim, out_feat, num_layers = 4, 32, 3, 3
    num_graphs, nodes_per_graph = 2, 8
    n_nodes = num_graphs * nodes_per_graph

    key = jax.random.PRNGKey(0)
    k_x, k_p = jax.random.split(key)

    x = jax.random.normal(k_x, (n_nodes, in_feat), jnp.float32)
    batch = jnp.repeat(jnp.arange(num_graphs, dtype=jnp.int32), nodes_per_graph)

    # Deterministic edges: bidirectional ring within each graph (E = 32).
    rows, cols = [], []
    for g in range(num_graphs):
        base = g * nodes_per_graph
        for i in range(nodes_per_graph):
            src = base + i
            dst = base + (i + 1) % nodes_per_graph
            rows += [src, dst]
            cols += [dst, src]
    edge_index = jnp.array([rows, cols], dtype=jnp.int32)

    params = make_force_gnn_params(k_p, in_feat, hidden_dim, out_feat, num_layers)

    coords = force_gnn_forward(params, x, edge_index, batch, num_graphs)
    coords = jax.block_until_ready(coords)

    assert coords.shape == (num_graphs, nodes_per_graph, out_feat)
    assert bool(jnp.all(jnp.isfinite(coords)))

    ref = _ref_forward(params, x, edge_index, num_graphs)
    assert bool(jnp.allclose(coords, ref, atol=5e-2, rtol=5e-2)), \
        "Pallas ForceGNN output mismatch vs JAX reference"

    print("KERNEL_OK")
</pallas_src>

<mosaic_0001>
module attributes {stable_mosaic.version = 11 : i64} {
  func.func @force_gnn_kernel(%arg0: i32, %arg1: memref<128x128xf32, #tpu.memory_space<vmem>>, %arg2: memref<128x128xbf16, #tpu.memory_space<vmem>>, %arg3: memref<128x128xbf16, #tpu.memory_space<vmem>>, %arg4: memref<3x128x128xbf16, #tpu.memory_space<vmem>>, %arg5: memref<3x1x128xf32, #tpu.memory_space<vmem>>, %arg6: memref<3x128x128xbf16, #tpu.memory_space<vmem>>, %arg7: memref<3x1x128xf32, #tpu.memory_space<vmem>>, %arg8: memref<3x256x128xbf16, #tpu.memory_space<vmem>>, %arg9: memref<3x1x128xf32, #tpu.memory_space<vmem>>, %arg10: memref<3x128x128xbf16, #tpu.memory_space<vmem>>, %arg11: memref<3x1x128xf32, #tpu.memory_space<vmem>>, %arg12: memref<128x128xf32, #tpu.memory_space<vmem>>, %arg13: memref<128x128xf32, #tpu.memory_space<vmem>>, %arg14: memref<128x256xbf16, #tpu.memory_space<vmem>>) attributes {dimension_semantics = [#tpu.dimension_semantics<arbitrary>], iteration_bounds = array<i64: 3>, scalar_prefetch = 0 : i64, scratch_operands = 2 : i64, tpu.core_type = #tpu.core_type<tc>, window_params = [{pipeline_mode = #tpu.pipeline_mode<synchronous>, transform_indices = @transform_0, window_bounds = array<i64: 128, 128>}, {pipeline_mode = #tpu.pipeline_mode<synchronous>, transform_indices = @transform_1, window_bounds = array<i64: 128, 128>}, {pipeline_mode = #tpu.pipeline_mode<synchronous>, transform_indices = @transform_2, window_bounds = array<i64: 128, 128>}, {pipeline_mode = #tpu.pipeline_mode<synchronous>, transform_indices = @transform_3, window_bounds = array<i64: 3, 128, 128>}, {pipeline_mode = #tpu.pipeline_mode<synchronous>, transform_indices = @transform_4, window_bounds = array<i64: 3, 1, 128>}, {pipeline_mode = #tpu.pipeline_mode<synchronous>, transform_indices = @transform_5, window_bounds = array<i64: 3, 128, 128>}, {pipeline_mode = #tpu.pipeline_mode<synchronous>, transform_indices = @transform_6, window_bounds = array<i64: 3, 1, 128>}, {pipeline_mode = #tpu.pipeline_mode<synchronous>, transform_indices = @transform_7, window_bounds = array<i64: 3, 256, 128>}, {pipeline_mode = #tpu.pipeline_mode<synchronous>, transform_indices = @transform_8, window_bounds = array<i64: 3, 1, 128>}, {pipeline_mode = #tpu.pipeline_mode<synchronous>, transform_indices = @transform_9, window_bounds = array<i64: 3, 128, 128>}, {pipeline_mode = #tpu.pipeline_mode<synchronous>, transform_indices = @transform_10, window_bounds = array<i64: 3, 1, 128>}, {pipeline_mode = #tpu.pipeline_mode<synchronous>, transform_indices = @transform_11, window_bounds = array<i64: 128, 128>}]} {
    %c0_i32 = arith.constant 0 : i32
    %0 = arith.cmpi eq, %arg0, %c0_i32 : i32
    %1 = arith.extui %0 : i1 to i32
    %c0_i32_0 = arith.constant 0 : i32
    %2 = arith.cmpi ne, %1, %c0_i32_0 : i32
    scf.if %2 {
      %c0_40 = arith.constant 0 : index
      %c0_41 = arith.constant 0 : index
      %68 = vector.load %arg1[%c0_40, %c0_41] : memref<128x128xf32, #tpu.memory_space<vmem>>, vector<128x128xf32>
      %c0_42 = arith.constant 0 : index
      %c0_43 = arith.constant 0 : index
      %69 = vector.load %arg13[%c0_42, %c0_43] : memref<128x128xf32, #tpu.memory_space<vmem>>, vector<128x128xf32>
      tpu.vector_store %arg13[%c0_42, %c0_43], %68 {strides = array<i32>} : memref<128x128xf32, #tpu.memory_space<vmem>>, vector<128x128xf32>,
    } else {
    }
    %c0 = arith.constant 0 : index
    %c0_1 = arith.constant 0 : index
    %3 = vector.load %arg13[%c0, %c0_1] : memref<128x128xf32, #tpu.memory_space<vmem>>, vector<128x128xf32>
    %4 = arith.truncf %3 : vector<128x128xf32> to vector<128x128xbf16>
    %c0_2 = arith.constant 0 : index
    %c0_3 = arith.constant 0 : index
    %5 = vector.load %arg2[%c0_2, %c0_3] : memref<128x128xbf16, #tpu.memory_space<vmem>>, vector<128x128xbf16>
    %cst = arith.constant dense<0.000000e+00> : vector<128x128xf32>
    %6 = tpu.matmul %5, %4, %cst {dimension_numbers = #tpu.dot_dimension_numbers<[1], [0], [0], [1], [0, 0, 1, 1], [], []>} : vector<128x128xbf16>, vector<128x128xbf16>, vector<128x128xf32> -> vector<128x128xf32>
    %7 = arith.truncf %6 : vector<128x128xf32> to vector<128x128xbf16>
    %8 = arith.index_cast %arg0 : i32 to index
    %c0_4 = arith.constant 0 : index
    %c0_5 = arith.constant 0 : index
    %9 = vector.load %arg4[%8, %c0_4, %c0_5] : memref<3x128x128xbf16, #tpu.memory_space<vmem>>, vector<1x128x128xbf16>
    %10 = vector.shape_cast %9 : vector<1x128x128xbf16> to vector<128x128xbf16>
    %cst_6 = arith.constant dense<0.000000e+00> : vector<128x128xf32>
    %11 = tpu.matmul %7, %10, %cst_6 {dimension_numbers = #tpu.dot_dimension_numbers<[1], [0], [0], [1], [0, 0, 1, 1], [], []>} : vector<128x128xbf16>, vector<128x128xbf16>, vector<128x128xf32> -> vector<128x128xf32>
    %12 = arith.index_cast %arg0 : i32 to index
    %c0_7 = arith.constant 0 : index
    %c0_8 = arith.constant 0 : index
    %13 = vector.load %arg5[%12, %c0_7, %c0_8] : memref<3x1x128xf32, #tpu.memory_space<vmem>>, vector<1x1x128xf32>
    %14 = vector.shape_cast %13 : vector<1x1x128xf32> to vector<1x128xf32>
    %15 = vector.broadcast %14 : vector<1x128xf32> to vector<128x128xf32>
    %16 = arith.addf %11, %15 : vector<128x128xf32>
    %cst_9 = arith.constant 0.000000e+00 : f32
    %17 = vector.broadcast %cst_9 : f32 to vector<128x128xf32>
    %18 = arith.maximumf %16, %17 : vector<128x128xf32>
    %19 = arith.truncf %18 : vector<128x128xf32> to vector<128x128xbf16>
    %20 = arith.index_cast %arg0 : i32 to index
    %c0_10 = arith.constant 0 : index
    %c0_11 = arith.constant 0 : index
    %21 = vector.load %arg6[%20, %c0_10, %c0_11] : memref<3x128x128xbf16, #tpu.memory_space<vmem>>, vector<1x128x128xbf16>
    %22 = vector.shape_cast %21 : vector<1x128x128xbf16> to vector<128x128xbf16>
    %cst_12 = arith.constant dense<0.000000e+00> : vector<128x128xf32>
    %23 = tpu.matmul %19, %22, %cst_12 {dimension_numbers = #tpu.dot_dimension_numbers<[1], [0], [0], [1], [0, 0, 1, 1], [], []>} : vector<128x128xbf16>, vector<128x128xbf16>, vector<128x128xf32> -> vector<128x128xf32>
    %24 = arith.index_cast %arg0 : i32 to index
    %c0_13 = arith.constant 0 : index
    %c0_14 = arith.constant 0 : index
    %25 = vector.load %arg7[%24, %c0_13, %c0_14] : memref<3x1x128xf32, #tpu.memory_space<vmem>>, vector<1x1x128xf32>
    %26 = vector.shape_cast %25 : vector<1x1x128xf32> to vector<1x128xf32>
    %27 = vector.broadcast %26 : vector<1x128xf32> to vector<128x128xf32>
    %28 = arith.addf %23, %27 : vector<128x128xf32>
    %c0_15 = arith.constant 0 : index
    %c0_16 = arith.constant 0 : index
    %29 = vector.load %arg3[%c0_15, %c0_16] : memref<128x128xbf16, #tpu.memory_space<vmem>>, vector<128x128xbf16>
    %30 = arith.truncf %28 : vector<128x128xf32> to vector<128x128xbf16>
    %cst_17 = arith.constant dense<0.000000e+00> : vector<128x128xf32>
    %31 = tpu.matmul %29, %30, %cst_17 {dimension_numbers = #tpu.dot_dimension_numbers<[1], [0], [0], [1], [0, 0, 1, 1], [], []>} : vector<128x128xbf16>, vector<128x128xbf16>, vector<128x128xf32> -> vector<128x128xf32>
    %c0_18 = arith.constant 0 : index
    %c0_19 = arith.constant 0 : index
    %32 = vector.load %arg14[%c0_18, %c0_19] : memref<128x256xbf16, #tpu.memory_space<vmem>>, vector<128x128xbf16>
    tpu.vector_store %arg14[%c0_18, %c0_19], %4 {strides = array<i32>} : memref<128x256xbf16, #tpu.memory_space<vmem>>, vector<128x128xbf16>,
    %33 = arith.truncf %31 : vector<128x128xf32> to vector<128x128xbf16>
    %c0_20 = arith.constant 0 : index
    %c128 = arith.constant 128 : index
    %34 = vector.load %arg14[%c0_20, %c128] : memref<128x256xbf16, #tpu.memory_space<vmem>>, vector<128x128xbf16>
    tpu.vector_store %arg14[%c0_20, %c128], %33 {strides = array<i32>} : memref<128x256xbf16, #tpu.memory_space<vmem>>, vector<128x128xbf16>,
    %c0_21 = arith.constant 0 : index
    %c0_22 = arith.constant 0 : index
    %35 = vector.load %arg14[%c0_21, %c0_22] : memref<128x256xbf16, #tpu.memory_space<vmem>>, vector<128x256xbf16>
    %36 = arith.index_cast %arg0 : i32 to index
    %c0_23 = arith.constant 0 : index
    %c0_24 = arith.constant 0 : index
    %37 = vector.load %arg8[%36, %c0_23, %c0_24] : memref<3x256x128xbf16, #tpu.memory_space<vmem>>, vector<1x256x128xbf16>
    %38 = vector.shape_cast %37 : vector<1x256x128xbf16> to vector<256x128xbf16>
    %cst_25 = arith.constant dense<0.000000e+00> : vector<128x128xf32>
    %39 = tpu.matmul %35, %38, %cst_25 {dimension_numbers = #tpu.dot_dimension_numbers<[1], [0], [0], [1], [0, 0, 1, 1], [], []>} : vector<128x256xbf16>, vector<256x128xbf16>, vector<128x128xf32> -> vector<128x128xf32>
    %40 = arith.index_cast %arg0 : i32 to index
    %c0_26 = arith.constant 0 : index
    %c0_27 = arith.constant 0 : index
    %41 = vector.load %arg9[%40, %c0_26, %c0_27] : memref<3x1x128xf32, #tpu.memory_space<vmem>>, vector<1x1x128xf32>
    %42 = vector.shape_cast %41 : vector<1x1x128xf32> to vector<1x128xf32>
    %43 = vector.broadcast %42 : vector<1x128xf32> to vector<128x128xf32>
    %44 = arith.addf %39, %43 : vector<128x128xf32>
    %cst_28 = arith.constant 0.000000e+00 : f32
    %45 = vector.broadcast %cst_28 : f32 to vector<128x128xf32>
    %46 = arith.maximumf %44, %45 : vector<128x128xf32>
    %47 = arith.truncf %46 : vector<128x128xf32> to vector<128x128xbf16>
    %48 = arith.index_cast %arg0 : i32 to index
    %c0_29 = arith.constant 0 : index
    %c0_30 = arith.constant 0 : index
    %49 = vector.load %arg10[%48, %c0_29, %c0_30] : memref<3x128x128xbf16, #tpu.memory_space<vmem>>, vector<1x128x128xbf16>
    %50 = vector.shape_cast %49 : vector<1x128x128xbf16> to vector<128x128xbf16>
    %cst_31 = arith.constant dense<0.000000e+00> : vector<128x128xf32>
    %51 = tpu.matmul %47, %50, %cst_31 {dimension_numbers = #tpu.dot_dimension_numbers<[1], [0], [0], [1], [0, 0, 1, 1], [], []>} : vector<128x128xbf16>, vector<128x128xbf16>, vector<128x128xf32> -> vector<128x128xf32>
    %52 = arith.index_cast %arg0 : i32 to index
    %c0_32 = arith.constant 0 : index
    %c0_33 = arith.constant 0 : index
    %53 = vector.load %arg11[%52, %c0_32, %c0_33] : memref<3x1x128xf32, #tpu.memory_space<vmem>>, vector<1x1x128xf32>
    %54 = vector.shape_cast %53 : vector<1x1x128xf32> to vector<1x128xf32>
    %55 = vector.broadcast %54 : vector<1x128xf32> to vector<128x128xf32>
    %56 = arith.addf %51, %55 : vector<128x128xf32>
    %c0_i32_34 = arith.constant 0 : i32
    %57 = arith.cmpi eq, %arg0, %c0_i32_34 : i32
    %58 = arith.extui %57 : i1 to i32
    %c0_i32_35 = arith.constant 0 : i32
    %59 = arith.cmpi ne, %58, %c0_i32_35 : i32
    scf.if %59 {
      %c0_40 = arith.constant 0 : index
      %c0_41 = arith.constant 0 : index
      %68 = vector.load %arg13[%c0_40, %c0_41] : memref<128x128xf32, #tpu.memory_space<vmem>>, vector<128x128xf32>
      tpu.vector_store %arg13[%c0_40, %c0_41], %56 {strides = array<i32>} : memref<128x128xf32, #tpu.memory_space<vmem>>, vector<128x128xf32>,
    } else {
    }
    %c0_i32_36 = arith.constant 0 : i32
    %60 = arith.cmpi sgt, %arg0, %c0_i32_36 : i32
    %c2_i32 = arith.constant 2 : i32
    %61 = arith.cmpi slt, %arg0, %c2_i32 : i32
    %62 = arith.andi %60, %61 : i1
    %63 = arith.extui %62 : i1 to i32
    %c0_i32_37 = arith.constant 0 : i32
    %64 = arith.cmpi ne, %63, %c0_i32_37 : i32
    scf.if %64 {
      %c0_40 = arith.constant 0 : index
      %c0_41 = arith.constant 0 : index
      %68 = vector.load %arg13[%c0_40, %c0_41] : memref<128x128xf32, #tpu.memory_space<vmem>>, vector<128x128xf32>
      %69 = arith.addf %56, %68 : vector<128x128xf32>
      %c0_42 = arith.constant 0 : index
      %c0_43 = arith.constant 0 : index
      %70 = vector.load %arg13[%c0_42, %c0_43] : memref<128x128xf32, #tpu.memory_space<vmem>>, vector<128x128xf32>
      tpu.vector_store %arg13[%c0_42, %c0_43], %69 {strides = array<i32>} : memref<128x128xf32, #tpu.memory_space<vmem>>, vector<128x128xf32>,
    } else {
    }
    %c2_i32_38 = arith.constant 2 : i32
    %65 = arith.cmpi eq, %arg0, %c2_i32_38 : i32
    %66 = arith.extui %65 : i1 to i32
    %c0_i32_39 = arith.constant 0 : i32
    %67 = arith.cmpi ne, %66, %c0_i32_39 : i32
    scf.if %67 {
      %c0_40 = arith.constant 0 : index
      %c0_41 = arith.constant 0 : index
      %68 = vector.load %arg12[%c0_40, %c0_41] : memref<128x128xf32, #tpu.memory_space<vmem>>, vector<128x128xf32>
      tpu.vector_store %arg12[%c0_40, %c0_41], %56 {strides = array<i32>} : memref<128x128xf32, #tpu.memory_space<vmem>>, vector<128x128xf32>,
    } else {
    }
    return
  }
  func.func @transform_0(%arg0: i32) -> (i32, i32) {
    %c0_i32 = arith.constant 0 : i32
    %c0_i32_0 = arith.constant 0 : i32
    %c0_i32_1 = arith.constant 0 : i32
    return %c0_i32, %c0_i32_0 : i32, i32
  }
  func.func @transform_1(%arg0: i32) -> (i32, i32) {
    %c0_i32 = arith.constant 0 : i32
    %c0_i32_0 = arith.constant 0 : i32
    %c0_i32_1 = arith.constant 0 : i32
    return %c0_i32, %c0_i32_0 : i32, i32
  }
  func.func @transform_2(%arg0: i32) -> (i32, i32) {
    %c0_i32 = arith.constant 0 : i32
    %c0_i32_0 = arith.constant 0 : i32
    %c0_i32_1 = arith.constant 0 : i32
    return %c0_i32, %c0_i32_0 : i32, i32
  }
  func.func @transform_3(%arg0: i32) -> (i32, i32, i32) {
    %c0_i32 = arith.constant 0 : i32
    %c0_i32_0 = arith.constant 0 : i32
    %c0_i32_1 = arith.constant 0 : i32
    %c0_i32_2 = arith.constant 0 : i32
    return %c0_i32, %c0_i32_0, %c0_i32_1 : i32, i32, i32
  }
  func.func @transform_4(%arg0: i32) -> (i32, i32, i32) {
    %c0_i32 = arith.constant 0 : i32
    %c0_i32_0 = arith.constant 0 : i32
    %c0_i32_1 = arith.constant 0 : i32
    %c0_i32_2 = arith.constant 0 : i32
    return %c0_i32, %c0_i32_0, %c0_i32_1 : i32, i32, i32
  }
  func.func @transform_5(%arg0: i32) -> (i32, i32, i32) {
    %c0_i32 = arith.constant 0 : i32
    %c0_i32_0 = arith.constant 0 : i32
    %c0_i32_1 = arith.constant 0 : i32
    %c0_i32_2 = arith.constant 0 : i32
    return %c0_i32, %c0_i32_0, %c0_i32_1 : i32, i32, i32
  }
  func.func @transform_6(%arg0: i32) -> (i32, i32, i32) {
    %c0_i32 = arith.constant 0 : i32
    %c0_i32_0 = arith.constant 0 : i32
    %c0_i32_1 = arith.constant 0 : i32
    %c0_i32_2 = arith.constant 0 : i32
    return %c0_i32, %c0_i32_0, %c0_i32_1 : i32, i32, i32
  }
  func.func @transform_7(%arg0: i32) -> (i32, i32, i32) {
    %c0_i32 = arith.constant 0 : i32
    %c0_i32_0 = arith.constant 0 : i32
    %c0_i32_1 = arith.constant 0 : i32
    %c0_i32_2 = arith.constant 0 : i32
    return %c0_i32, %c0_i32_0, %c0_i32_1 : i32, i32, i32
  }
  func.func @transform_8(%arg0: i32) -> (i32, i32, i32) {
    %c0_i32 = arith.constant 0 : i32
    %c0_i32_0 = arith.constant 0 : i32
    %c0_i32_1 = arith.constant 0 : i32
    %c0_i32_2 = arith.constant 0 : i32
    return %c0_i32, %c0_i32_0, %c0_i32_1 : i32, i32, i32
  }
  func.func @transform_9(%arg0: i32) -> (i32, i32, i32) {
    %c0_i32 = arith.constant 0 : i32
    %c0_i32_0 = arith.constant 0 : i32
    %c0_i32_1 = arith.constant 0 : i32
    %c0_i32_2 = arith.constant 0 : i32
    return %c0_i32, %c0_i32_0, %c0_i32_1 : i32, i32, i32
  }
  func.func @transform_10(%arg0: i32) -> (i32, i32, i32) {
    %c0_i32 = arith.constant 0 : i32
    %c0_i32_0 = arith.constant 0 : i32
    %c0_i32_1 = arith.constant 0 : i32
    %c0_i32_2 = arith.constant 0 : i32
    return %c0_i32, %c0_i32_0, %c0_i32_1 : i32, i32, i32
  }
  func.func @transform_11(%arg0: i32) -> (i32, i32) {
    %c0_i32 = arith.constant 0 : i32
    %c0_i32_0 = arith.constant 0 : i32
    %c0_i32_1 = arith.constant 0 : i32
    return %c0_i32, %c0_i32_0 : i32, i32
  }
}

</mosaic_0001>

<llo_original>
// kernel: tpu_custom_call.1
$region0: #{tpu_custom_call.1}
  #allocation0 [shape = 'u32[]', space=smem, size = 0x4, offset = 0x4, fixed_abs, tag = 'smem constant byte address 0x4 - core index']
  #allocation1 [shape = 'u32[144,128]{1,0:T(1,128)}', space=vmem, size = 0x12000, scoped, tag = 'internal scratch']
  #allocation2 [shape = 'f32[128,128]{1,0:T(8,128)}', space=vmem, size = 0x10000, scoped, tag = 'scratch operand']
  #allocation3 [shape = 'bf16[128,256]{1,0:T(8,128)(2,1)}', space=vmem, size = 0x10000, scoped, tag = 'scratch operand']
  %s0 = inlined_call_operand.hbm [shape: f32[128,128], index: 0, kind: input, shape index: {}]
  %s1 = inlined_call_operand.hbm [shape: bf16[128,128], index: 1, kind: input, shape index: {}]
  %s2 = inlined_call_operand.hbm [shape: bf16[128,128], index: 2, kind: input, shape index: {}]
  %s3 = inlined_call_operand.hbm [shape: bf16[3,128,128], index: 3, kind: input, shape index: {}]
  %s4 = inlined_call_operand.vmem [shape: f32[3,1,128], index: 4, kind: input, shape index: {}]
  %s5 = inlined_call_operand.hbm [shape: bf16[3,128,128], index: 5, kind: input, shape index: {}]
  %s6 = inlined_call_operand.vmem [shape: f32[3,1,128], index: 6, kind: input, shape index: {}]
  %s7 = inlined_call_operand.hbm [shape: bf16[3,256,128], index: 7, kind: input, shape index: {}]
  %s8 = inlined_call_operand.vmem [shape: f32[3,1,128], index: 8, kind: input, shape index: {}]
  %s9 = inlined_call_operand.hbm [shape: bf16[3,128,128], index: 9, kind: input, shape index: {}]
  %s10 = inlined_call_operand.vmem [shape: f32[3,1,128], index: 10, kind: input, shape index: {}]
  %s11 = inlined_call_operand.hbm [shape: f32[128,128], index: 11, kind: output, shape index: {}]
  %s12 = sld [smem:[#allocation0]]
  $region121: #{tpu_custom_call.1} parent=0
    _
  %s14 = ssub.s32 1, %s12
  %s15 = scalar_select 0, %s14, %s12
  $region1: #{tpu_custom_call.1} parent=0
    #allocation4 [shape = 'u8[65536]{0}', space=vmem, size = 0x10000, scoped, tag = 'input window, operand 0, single buffered']
    #allocation5 [shape = 's32[2]{0}', space=sflag, size = 0x8, scoped, tag = 'scoped memory for tpu_custom_call.1']
    #allocation6 [shape = 's32[2]{0}', space=sflag, size = 0x8, scoped, tag = 'scoped memory for tpu_custom_call.1']
    #allocation7 [shape = 'u8[32768]{0}', space=vmem, size = 0x8000, scoped, tag = 'input window, operand 1, single buffered']
    #allocation8 [shape = 's32[1]{0}', space=sflag, size = 0x4, scoped, tag = 'scoped memory for tpu_custom_call.1']
    #allocation9 [shape = 'u8[32768]{0}', space=vmem, size = 0x8000, scoped, tag = 'input window, operand 2, single buffered']
    #allocation10 [shape = 'u8[98304]{0}', space=vmem, size = 0x18000, scoped, tag = 'input window, operand 3, single buffered']
    #allocation11 [shape = 's32[1]{0}', space=sflag, size = 0x4, scoped, tag = 'scoped memory for tpu_custom_call.1']
    #allocation12 [shape = 'u8[98304]{0}', space=vmem, size = 0x18000, scoped, tag = 'input window, operand 5, single buffered']
    #allocation13 [shape = 'u8[196608]{0}', space=vmem, size = 0x30000, scoped, tag = 'input window, operand 7, single buffered']
    #allocation14 [shape = 's32[1]{0}', space=sflag, size = 0x4, scoped, tag = 'scoped memory for tpu_custom_call.1']
    #allocation15 [shape = 'u8[98304]{0}', space=vmem, size = 0x18000, scoped, tag = 'input window, operand 9, single buffered']
    #allocation16 [shape = 'u8[65536]{0}', space=vmem, size = 0x10000, scoped, tag = 'output window, operand 0, single buffered']
    %16 = vsyncpa [#allocation5], 0
    %17 = vsyncpa [#allocation8], 0
    %18 = vsyncpa [#allocation11], 0
    %19 = vsyncpa [#allocation14], 0
    %20 = vsyncpa [#allocation6], 0
    loop: start=0, step=1, limit=5
    $region2: #{tpu_custom_call.1} parent=1 // loop_pre_header
      _
    $region3: #{tpu_custom_call.1} parent=1 // loop_header
      %s22 = sphi 0, %s26
      %p23 = scmp.ge.s32.totalorder %s22, 5
      %s30 = sphi 0, %s30
      %s32 = sphi 0, %s30
      %s33 = sphi 0, %s32
      %s47 = sphi 0, %s33
      %s51 = sphi 0, %s51
      %s53 = sphi 0, %s51
      %s54 = sphi 0, %s53
      %s68 = sphi 0, %s54
      %s72 = sphi 0, %s72
      %s74 = sphi 0, %s72
      %s75 = sphi 0, %s74
      %s89 = sphi 0, %s75
      %s93 = sphi 0, %s93
      %s95 = sphi 0, %s93
      %s96 = sphi 0, %s95
      %s110 = sphi 0, %s96
      %s114 = sphi 0, %s114
      %s116 = sphi 0, %s114
      %s117 = sphi 0, %s116
      %s131 = sphi 0, %s117
      %s135 = sphi 0, %s135
      %s137 = sphi 0, %s135
      %s138 = sphi 0, %s137
      %s152 = sphi 0, %s138
      %s156 = sphi 0, %s156
      %s158 = sphi 0, %s156
      %s159 = sphi 0, %s158
      %s173 = sphi 0, %s159
      %s177 = sphi 0, %s177
      %s179 = sphi 0, %s177
      %s180 = sphi 0, %s179
      %s194 = sphi 0, %s180
      %s198 = sphi 0, %s198
      %s200 = sphi 0, %s198
      %s201 = sphi 0, %s200
      %s215 = sphi 0, %s201
      %s219 = sphi 0, %s219
      %s221 = sphi 0, %s219
      %s222 = sphi 0, %s221
      %s236 = sphi 0, %s222
      %s240 = sphi 0, %s240
      %s242 = sphi 0, %s240
      %s243 = sphi 0, %s242
      %s257 = sphi 0, %s243
      %s261 = sphi 0, %s261
      %s263 = sphi 0, %s261
      %s264 = sphi 0, %s263
      %s278 = sphi 0, %s264
    $region4: #{tpu_custom_call.1} parent=1 // loop_header_branch
      %25 = sbr.rel (%p23) target = $region8
    $region5: #{tpu_custom_call.1} parent=1 // loop_body
      %s27 = ssub.s32 %s22, 1
      %s28 = ssub.s32 %s22, 2
      %s29 = sadd.s32 %s22, 1
      %s31 = sadd.s32 %s30, 1
      %p34 = scmp.eq.s32.totalorder %s22, 2
      %p35 = scmp.ne.s32.totalorder %s30, %s32
      %p36 = scmp.eq.s32.totalorder %s22, 0
      %p37 = por %p35, %p36
      %p38 = scmp.ne.s32.totalorder %s30, %s32
      %p39 = scmp.eq.s32.totalorder %s27, 2
      %p40 = por %p38, %p39
      %p41 = scmp.ne.s32.totalorder %s32, %s33
      %p42 = scmp.eq.s32.totalorder %s27, 0
      %p43 = por %p41, %p42
      %p44 = scmp.ne.s32.totalorder %s32, %s33
      %p45 = scmp.eq.s32.totalorder %s28, 2
      %p46 = por %p44, %p45
      %p48 = scmp.ne.s32.totalorder %s33, %s47
      %p49 = scmp.eq.s32.totalorder %s28, 0
      %p50 = por %p48, %p49
      %s52 = sadd.s32 %s51, 1
      %p55 = scmp.eq.s32.totalorder %s22, 2
      %p56 = scmp.ne.s32.totalorder %s51, %s53
      %p57 = scmp.eq.s32.totalorder %s22, 0
      %p58 = por %p56, %p57
      %p59 = scmp.ne.s32.totalorder %s51, %s53
      %p60 = scmp.eq.s32.totalorder %s27, 2
      %p61 = por %p59, %p60
      %p62 = scmp.ne.s32.totalorder %s53, %s54
      %p63 = scmp.eq.s32.totalorder %s27, 0
      %p64 = por %p62, %p63
      %p65 = scmp.ne.s32.totalorder %s53, %s54
      %p66 = scmp.eq.s32.totalorder %s28, 2
      %p67 = por %p65, %p66
      %p69 = scmp.ne.s32.totalorder %s54, %s68
      %p70 = scmp.eq.s32.totalorder %s28, 0
      %p71 = por %p69, %p70
      %s73 = sadd.s32 %s72, 1
      %p76 = scmp.eq.s32.totalorder %s22, 2
      %p77 = scmp.ne.s32.totalorder %s72, %s74
      %p78 = scmp.eq.s32.totalorder %s22, 0
      %p79 = por %p77, %p78
      %p80 = scmp.ne.s32.totalorder %s72, %s74
      %p81 = scmp.eq.s32.totalorder %s27, 2
      %p82 = por %p80, %p81
      %p83 = scmp.ne.s32.totalorder %s74, %s75
      %p84 = scmp.eq.s32.totalorder %s27, 0
      %p85 = por %p83, %p84
      %p86 = scmp.ne.s32.totalorder %s74, %s75
      %p87 = scmp.eq.s32.totalorder %s28, 2
      %p88 = por %p86, %p87
      %p90 = scmp.ne.s32.totalorder %s75, %s89
      %p91 = scmp.eq.s32.totalorder %s28, 0
      %p92 = por %p90, %p91
      %s94 = sadd.s32 %s93, 1
      %p97 = scmp.eq.s32.totalorder %s22, 2
      %p98 = scmp.ne.s32.totalorder %s93, %s95
      %p99 = scmp.eq.s32.totalorder %s22, 0
      %p100 = por %p98, %p99
      %p101 = scmp.ne.s32.totalorder %s93, %s95
      %p102 = scmp.eq.s32.totalorder %s27, 2
      %p103 = por %p101, %p102
      %p104 = scmp.ne.s32.totalorder %s95, %s96
      %p105 = scmp.eq.s32.totalorder %s27, 0
      %p106 = por %p104, %p105
      %p107 = scmp.ne.s32.totalorder %s95, %s96
      %p108 = scmp.eq.s32.totalorder %s28, 2
      %p109 = por %p107, %p108
      %p111 = scmp.ne.s32.totalorder %s96, %s110
      %p112 = scmp.eq.s32.totalorder %s28, 0
      %p113 = por %p111, %p112
      %s115 = sadd.s32 %s114, 1
      %p118 = scmp.eq.s32.totalorder %s22, 2
      %p119 = scmp.ne.s32.totalorder %s114, %s116
      %p120 = scmp.eq.s32.totalorder %s22, 0
      %p121 = por %p119, %p120
      %p122 = scmp.ne.s32.totalorder %s114, %s116
      %p123 = scmp.eq.s32.totalorder %s27, 2
      %p124 = por %p122, %p123
      %p125 = scmp.ne.s32.totalorder %s116, %s117
      %p126 = scmp.eq.s32.totalorder %s27, 0
      %p127 = por %p125, %p126
      %p128 = scmp.ne.s32.totalorder %s116, %s117
      %p129 = scmp.eq.s32.totalorder %s28, 2
      %p130 = por %p128, %p129
      %p132 = scmp.ne.s32.totalorder %s117, %s131
      %p133 = scmp.eq.s32.totalorder %s28, 0
      %p134 = por %p132, %p133
      %s136 = sadd.s32 %s135, 1
      %p139 = scmp.eq.s32.totalorder %s22, 2
      %p140 = scmp.ne.s32.totalorder %s135, %s137
      %p141 = scmp.eq.s32.totalorder %s22, 0
      %p142 = por %p140, %p141
      %p143 = scmp.ne.s32.totalorder %s135, %s137
      %p144 = scmp.eq.s32.totalorder %s27, 2
      %p145 = por %p143, %p144
      %p146 = scmp.ne.s32.totalorder %s137, %s138
      %p147 = scmp.eq.s32.totalorder %s27, 0
      %p148 = por %p146, %p147
      %p149 = scmp.ne.s32.totalorder %s137, %s138
      %p150 = scmp.eq.s32.totalorder %s28, 2
      %p151 = por %p149, %p150
      %p153 = scmp.ne.s32.totalorder %s138, %s152
      %p154 = scmp.eq.s32.totalorder %s28, 0
      %p155 = por %p153, %p154
      %s157 = sadd.s32 %s156, 1
      %p160 = scmp.eq.s32.totalorder %s22, 2
      %p161 = scmp.ne.s32.totalorder %s156, %s158
      %p162 = scmp.eq.s32.totalorder %s22, 0
      %p163 = por %p161, %p162
      %p164 = scmp.ne.s32.totalorder %s156, %s158
      %p165 = scmp.eq.s32.totalorder %s27, 2
      %p166 = por %p164, %p165
      %p167 = scmp.ne.s32.totalorder %s158, %s159
      %p168 = scmp.eq.s32.totalorder %s27, 0
      %p169 = por %p167, %p168
      %p170 = scmp.ne.s32.totalorder %s158, %s159
      %p171 = scmp.eq.s32.totalorder %s28, 2
      %p172 = por %p170, %p171
      %p174 = scmp.ne.s32.totalorder %s159, %s173
      %p175 = scmp.eq.s32.totalorder %s28, 0
      %p176 = por %p174, %p175
      %s178 = sadd.s32 %s177, 1
      %p181 = scmp.eq.s32.totalorder %s22, 2
      %p182 = scmp.ne.s32.totalorder %s177, %s179
      %p183 = scmp.eq.s32.totalorder %s22, 0
      %p184 = por %p182, %p183
      %p185 = scmp.ne.s32.totalorder %s177, %s179
      %p186 = scmp.eq.s32.totalorder %s27, 2
      %p187 = por %p185, %p186
      %p188 = scmp.ne.s32.totalorder %s179, %s180
      %p189 = scmp.eq.s32.totalorder %s27, 0
      %p190 = por %p188, %p189
      %p191 = scmp.ne.s32.totalorder %s179, %s180
      %p192 = scmp.eq.s32.totalorder %s28, 2
      %p193 = por %p191, %p192
      %p195 = scmp.ne.s32.totalorder %s180, %s194
      %p196 = scmp.eq.s32.totalorder %s28, 0
      %p197 = por %p195, %p196
      %s199 = sadd.s32 %s198, 1
      %p202 = scmp.eq.s32.totalorder %s22, 2
      %p203 = scmp.ne.s32.totalorder %s198, %s200
      %p204 = scmp.eq.s32.totalorder %s22, 0
      %p205 = por %p203, %p204
      %p206 = scmp.ne.s32.totalorder %s198, %s200
      %p207 = scmp.eq.s32.totalorder %s27, 2
      %p208 = por %p206, %p207
      %p209 = scmp.ne.s32.totalorder %s200, %s201
      %p210 = scmp.eq.s32.totalorder %s27, 0
      %p211 = por %p209, %p210
      %p212 = scmp.ne.s32.totalorder %s200, %s201
      %p213 = scmp.eq.s32.totalorder %s28, 2
      %p214 = por %p212, %p213
      %p216 = scmp.ne.s32.totalorder %s201, %s215
      %p217 = scmp.eq.s32.totalorder %s28, 0
      %p218 = por %p216, %p217
      %s220 = sadd.s32 %s219, 1
      %p223 = scmp.eq.s32.totalorder %s22, 2
      %p224 = scmp.ne.s32.totalorder %s219, %s221
      %p225 = scmp.eq.s32.totalorder %s22, 0
      %p226 = por %p224, %p225
      %p227 = scmp.ne.s32.totalorder %s219, %s221
      %p228 = scmp.eq.s32.totalorder %s27, 2
      %p229 = por %p227, %p228
      %p230 = scmp.ne.s32.totalorder %s221, %s222
      %p231 = scmp.eq.s32.totalorder %s27, 0
      %p232 = por %p230, %p231
      %p233 = scmp.ne.s32.totalorder %s221, %s222
      %p234 = scmp.eq.s32.totalorder %s28, 2
      %p235 = por %p233, %p234
      %p237 = scmp.ne.s32.totalorder %s222, %s236
      %p238 = scmp.eq.s32.totalorder %s28, 0
      %p239 = por %p237, %p238
      %s241 = sadd.s32 %s240, 1
      %p244 = scmp.eq.s32.totalorder %s22, 2
      %p245 = scmp.ne.s32.totalorder %s240, %s242
      %p246 = scmp.eq.s32.totalorder %s22, 0
      %p247 = por %p245, %p246
      %p248 = scmp.ne.s32.totalorder %s240, %s242
      %p249 = scmp.eq.s32.totalorder %s27, 2
      %p250 = por %p248, %p249
      %p251 = scmp.ne.s32.totalorder %s242, %s243
      %p252 = scmp.eq.s32.totalorder %s27, 0
      %p253 = por %p251, %p252
      %p254 = scmp.ne.s32.totalorder %s242, %s243
      %p255 = scmp.eq.s32.totalorder %s28, 2
      %p256 = por %p254, %p255
      %p258 = scmp.ne.s32.totalorder %s243, %s257
      %p259 = scmp.eq.s32.totalorder %s28, 0
      %p260 = por %p258, %p259
      %s262 = sadd.s32 %s261, 1
      %p265 = scmp.eq.s32.totalorder %s22, 2
      %p266 = scmp.ne.s32.totalorder %s261, %s263
      %p267 = scmp.eq.s32.totalorder %s22, 0
      %p268 = por %p266, %p267
      %p269 = scmp.ne.s32.totalorder %s261, %s263
      %p270 = scmp.eq.s32.totalorder %s27, 2
      %p271 = por %p269, %p270
      %p272 = scmp.ne.s32.totalorder %s263, %s264
      %p273 = scmp.eq.s32.totalorder %s27, 0
      %p274 = por %p272, %p273
      %p275 = scmp.ne.s32.totalorder %s263, %s264
      %p276 = scmp.eq.s32.totalorder %s28, 2
      %p277 = por %p275, %p276
      %p279 = scmp.ne.s32.totalorder %s264, %s278
      %p280 = scmp.eq.s32.totalorder %s28, 0
      %p281 = por %p279, %p280
      %p282 = scmp.le.s32.totalorder 1, %s22
      %p283 = scmp.lt.s32.totalorder %s22, 4
      %p284 = pnand %p282, %p283
      %p285 = pneg %p284
      // Predicated region
      $region9: #{tpu_custom_call.1} parent=5 // pred_check
        _
      $region10: #{tpu_custom_call.1} parent=5 // pred_check_branch
        %287 = sbr.rel (%p284) target = $region12
      $region11: #{tpu_custom_call.1} parent=5 // pred_region
        %s288 = ssub.s32 %s22, 1
        // Predicated region
        $region13: #{tpu_custom_call.1} parent=11 // pred_check
          %p289 = pneg %p43
        $region14: #{tpu_custom_call.1} parent=11 // pred_check_branch
          %291 = sbr.rel (%p289) target = $region16
        $region15: #{tpu_custom_call.1} parent=11 // pred_region
          %s293 = ssub.s32 2048, 2048
          %294 = vsyncadd [#allocation5], %s293
          %s295 = sshll.u32 [#allocation4], 4
          %s296 = int_to_ptr.vmem [resolvable:$true] %s295
          %301 = dma.hbm_to_vmem [thread:$0]  %s0, 2048, %s296, [#allocation5], 128, 128, 8
        $region16: #{tpu_custom_call.1} parent=11 // pred_fallthru
          _
        // Predicated region
        $region17: #{tpu_custom_call.1} parent=11 // pred_check
          %p302 = pneg %p64
        $region18: #{tpu_custom_call.1} parent=11 // pred_check_branch
          %304 = sbr.rel (%p302) target = $region20
        $region19: #{tpu_custom_call.1} parent=11 // pred_region
          %s306 = ssub.s32 1024, 1024
          %307 = vsyncadd [#allocation8], %s306
          %s308 = sshll.u32 [#allocation7], 4
          %s309 = int_to_ptr.vmem [resolvable:$true] %s308
          %314 = dma.hbm_to_vmem [thread:$0]  %s1, 1024, %s309, [#allocation8], 64, 64, 4
        $region20: #{tpu_custom_call.1} parent=11 // pred_fallthru
          _
        // Predicated region
        $region21: #{tpu_custom_call.1} parent=11 // pred_check
          %p315 = pneg %p85
        $region22: #{tpu_custom_call.1} parent=11 // pred_check_branch
          %317 = sbr.rel (%p315) target = $region24
        $region23: #{tpu_custom_call.1} parent=11 // pred_region
          %s319 = ssub.s32 1024, 1024
          %320 = vsyncadd [#allocation8], %s319
          %s321 = sshll.u32 [#allocation9], 4
          %s322 = int_to_ptr.vmem [resolvable:$true] %s321
          %327 = dma.hbm_to_vmem [thread:$0]  %s2, 1024, %s322, [#allocation8], 64, 64, 4
        $region24: #{tpu_custom_call.1} parent=11 // pred_fallthru
          _
        // Predicated region
        $region25: #{tpu_custom_call.1} parent=11 // pred_check
          %p328 = pneg %p106
        $region26: #{tpu_custom_call.1} parent=11 // pred_check_branch
          %330 = sbr.rel (%p328) target = $region28
        $region27: #{tpu_custom_call.1} parent=11 // pred_region
          %s332 = ssub.s32 3072, 3072
          %333 = vsyncadd [#allocation11], %s332
          %s334 = sshll.u32 [#allocation10], 4
          %s335 = int_to_ptr.vmem [resolvable:$true] %s334
          %340 = dma.hbm_to_vmem [thread:$0]  %s3, 3072, %s335, [#allocation11], 64, 64, 4
        $region28: #{tpu_custom_call.1} parent=11 // pred_fallthru
          _
        // Predicated region
        $region29: #{tpu_custom_call.1} parent=11 // pred_check
          %p341 = pneg %p127
        $region30: #{tpu_custom_call.1} parent=11 // pred_check_branch
          %343 = sbr.rel (%p341) target = $region32
        $region31: #{tpu_custom_call.1} parent=11 // pred_region
          _
        $region32: #{tpu_custom_call.1} parent=11 // pred_fallthru
          _
        // Predicated region
        $region33: #{tpu_custom_call.1} parent=11 // pred_check
          %p344 = pneg %p148
        $region34: #{tpu_custom_call.1} parent=11 // pred_check_branch
          %346 = sbr.rel (%p344) target = $region36
        $region35: #{tpu_custom_call.1} parent=11 // pred_region
          %s348 = ssub.s32 3072, 3072
          %349 = vsyncadd [#allocation11], %s348
          %s350 = sshll.u32 [#allocation12], 4
          %s351 = int_to_ptr.vmem [resolvable:$true] %s350
          %356 = dma.hbm_to_vmem [thread:$0]  %s5, 3072, %s351, [#allocation11], 64, 64, 4
        $region36: #{tpu_custom_call.1} parent=11 // pred_fallthru
          _
        // Predicated region
        $region37: #{tpu_custom_call.1} parent=11 // pred_check
          %p357 = pneg %p169
        $region38: #{tpu_custom_call.1} parent=11 // pred_check_branch
          %359 = sbr.rel (%p357) target = $region40
        $region39: #{tpu_custom_call.1} parent=11 // pred_region
          _
        $region40: #{tpu_custom_call.1} parent=11 // pred_fallthru
          _
        // Predicated region
        $region41: #{tpu_custom_call.1} parent=11 // pred_check
          %p360 = pneg %p190
        $region42: #{tpu_custom_call.1} parent=11 // pred_check_branch
          %362 = sbr.rel (%p360) target = $region44
        $region43: #{tpu_custom_call.1} parent=11 // pred_region
          %s364 = ssub.s32 6144, 6144
          %365 = vsyncadd [#allocation14], %s364
          %s366 = sshll.u32 [#allocation13], 4
          %s367 = int_to_ptr.vmem [resolvable:$true] %s366
          %372 = dma.hbm_to_vmem [thread:$0]  %s7, 6144, %s367, [#allocation14], 64, 64, 4
        $region44: #{tpu_custom_call.1} parent=11 // pred_fallthru
          _
        // Predicated region
        $region45: #{tpu_custom_call.1} parent=11 // pred_check
          %p373 = pneg %p211
        $region46: #{tpu_custom_call.1} parent=11 // pred_check_branch
          %375 = sbr.rel (%p373) target = $region48
        $region47: #{tpu_custom_call.1} parent=11 // pred_region
          _
        $region48: #{tpu_custom_call.1} parent=11 // pred_fallthru
          _
        // Predicated region
        $region49: #{tpu_custom_call.1} parent=11 // pred_check
          %p376 = pneg %p232
        $region50: #{tpu_custom_call.1} parent=11 // pred_check_branch
          %378 = sbr.rel (%p376) target = $region52
        $region51: #{tpu_custom_call.1} parent=11 // pred_region
          %s380 = ssub.s32 3072, 3072
          %381 = vsyncadd [#allocation14], %s380
          %s382 = sshll.u32 [#allocation15], 4
          %s383 = int_to_ptr.vmem [resolvable:$true] %s382
          %388 = dma.hbm_to_vmem [thread:$0]  %s9, 3072, %s383, [#allocation14], 64, 64, 4
        $region52: #{tpu_custom_call.1} parent=11 // pred_fallthru
          _
        // Predicated region
        $region53: #{tpu_custom_call.1} parent=11 // pred_check
          %p389 = pneg %p253
        $region54: #{tpu_custom_call.1} parent=11 // pred_check_branch
          %391 = sbr.rel (%p389) target = $region56
        $region55: #{tpu_custom_call.1} parent=11 // pred_region
          _
        $region56: #{tpu_custom_call.1} parent=11 // pred_fallthru
          _
      $region12: #{tpu_custom_call.1} parent=5 // pred_fallthru
        _
      %p392 = scmp.lt.s32.totalorder %s22, 3
      // Predicated region
      $region57: #{tpu_custom_call.1} parent=5 // pred_check
        %p393 = pneg %p392
      $region58: #{tpu_custom_call.1} parent=5 // pred_check_branch
        %395 = sbr.rel (%p393) target = $region60
      $region59: #{tpu_custom_call.1} parent=5 // pred_region
        _
      $region60: #{tpu_custom_call.1} parent=5 // pred_fallthru
        _
      %p396 = scmp.le.s32.totalorder 1, %s22
      %p397 = scmp.lt.s32.totalorder %s22, 4
      %p398 = pnand %p396, %p397
      %p399 = pneg %p398
      // Predicated region
      $region61: #{tpu_custom_call.1} parent=5 // pred_check
        _
      $region62: #{tpu_custom_call.1} parent=5 // pred_check_branch
        %401 = sbr.rel (%p398) target = $region64
      $region63: #{tpu_custom_call.1} parent=5 // pred_region
        %s402 = ssub.s32 %s22, 1
        // Predicated region
        $region65: #{tpu_custom_call.1} parent=63 // pred_check
          %p403 = pneg %p43
        $region66: #{tpu_custom_call.1} parent=63 // pred_check_branch
          %405 = sbr.rel (%p403) target = $region68
        $region67: #{tpu_custom_call.1} parent=63 // pred_region
          %406 = dma.done [#allocation5], 2048
        $region68: #{tpu_custom_call.1} parent=63 // pred_fallthru
          _
        // Predicated region
        $region69: #{tpu_custom_call.1} parent=63 // pred_check
          %p407 = pneg %p64
        $region70: #{tpu_custom_call.1} parent=63 // pred_check_branch
          %409 = sbr.rel (%p407) target = $region72
        $region71: #{tpu_custom_call.1} parent=63 // pred_region
          %410 = dma.done [#allocation8], 1024
        $region72: #{tpu_custom_call.1} parent=63 // pred_fallthru
          _
        // Predicated region
        $region73: #{tpu_custom_call.1} parent=63 // pred_check
          %p411 = pneg %p85
        $region74: #{tpu_custom_call.1} parent=63 // pred_check_branch
          %413 = sbr.rel (%p411) target = $region76
        $region75: #{tpu_custom_call.1} parent=63 // pred_region
          %414 = dma.done [#allocation8], 1024
        $region76: #{tpu_custom_call.1} parent=63 // pred_fallthru
          _
        // Predicated region
        $region77: #{tpu_custom_call.1} parent=63 // pred_check
          %p415 = pneg %p106
        $region78: #{tpu_custom_call.1} parent=63 // pred_check_branch
          %417 = sbr.rel (%p415) target = $region80
        $region79: #{tpu_custom_call.1} parent=63 // pred_region
          %418 = dma.done [#allocation11], 3072
        $region80: #{tpu_custom_call.1} parent=63 // pred_fallthru
          _
        // Predicated region
        $region81: #{tpu_custom_call.1} parent=63 // pred_check
          %p419 = pneg %p148
        $region82: #{tpu_custom_call.1} parent=63 // pred_check_branch
          %421 = sbr.rel (%p419) target = $region84
        $region83: #{tpu_custom_call.1} parent=63 // pred_region
          %422 = dma.done [#allocation11], 3072
        $region84: #{tpu_custom_call.1} parent=63 // pred_fallthru
          _
        // Predicated region
        $region85: #{tpu_custom_call.1} parent=63 // pred_check
          %p423 = pneg %p190
        $region86: #{tpu_custom_call.1} parent=63 // pred_check_branch
          %425 = sbr.rel (%p423) target = $region88
        $region87: #{tpu_custom_call.1} parent=63 // pred_region
          %426 = dma.done [#allocation14], 6144
        $region88: #{tpu_custom_call.1} parent=63 // pred_fallthru
          _
        // Predicated region
        $region89: #{tpu_custom_call.1} parent=63 // pred_check
          %p427 = pneg %p232
        $region90: #{tpu_custom_call.1} parent=63 // pred_check_branch
          %429 = sbr.rel (%p427) target = $region92
        $region91: #{tpu_custom_call.1} parent=63 // pred_region
          %430 = dma.done [#allocation14], 3072
        $region92: #{tpu_custom_call.1} parent=63 // pred_fallthru
          _
        %p431 = pneg %p43
        %p432 = pneg %p40
        %p433 = pneg %p64
        %p434 = pneg %p61
        %p435 = pneg %p85
        %p436 = pneg %p82
        %p437 = pneg %p106
        %p438 = pneg %p103
        %p439 = pneg %p127
        %p440 = pneg %p124
        %p441 = pneg %p148
        %p442 = pneg %p145
        %p443 = pneg %p169
        %p444 = pneg %p166
        %p445 = pneg %p190
        %p446 = pneg %p187
        %p447 = pneg %p211
        %p448 = pneg %p208
        %p449 = pneg %p232
        %p450 = pneg %p229
        %p451 = pneg %p253
        %p452 = pneg %p250
        %p453 = pneg %p274
        %p454 = pneg %p271
        %p456 = scmp.eq.s32.totalorder %s27, 0
        // Predicated region
        $region93: #{tpu_custom_call.1} parent=63 // pred_check
          %p457 = pneg %p456
        $region94: #{tpu_custom_call.1} parent=63 // pred_check_branch
          %459 = sbr.rel (%p457) target = $region96
        $region95: #{tpu_custom_call.1} parent=63 // pred_region
          %v460 = vld [vmem:[#allocation4] sm:$0xff]
          %v461 = vld [vmem:[#allocation4 + $0x8] sm:$0xff]
          %v462 = vld [vmem:[#allocation4 + $0x10] sm:$0xff]
          %v463 = vld [vmem:[#allocation4 + $0x18] sm:$0xff]
          %v464 = vld [vmem:[#allocation4 + $0x20] sm:$0xff]
          %v465 = vld [vmem:[#allocation4 + $0x28] sm:$0xff]
          %v466 = vld [vmem:[#allocation4 + $0x30] sm:$0xff]
          %v467 = vld [vmem:[#allocation4 + $0x38] sm:$0xff]
          %v468 = vld [vmem:[#allocation4 + $0x40] sm:$0xff]
          %v469 = vld [vmem:[#allocation4 + $0x48] sm:$0xff]
          %v470 = vld [vmem:[#allocation4 + $0x50] sm:$0xff]
          %v471 = vld [vmem:[#allocation4 + $0x58] sm:$0xff]
          %v472 = vld [vmem:[#allocation4 + $0x60] sm:$0xff]
          %v473 = vld [vmem:[#allocation4 + $0x68] sm:$0xff]
          %v474 = vld [vmem:[#allocation4 + $0x70] sm:$0xff]
          %v475 = vld [vmem:[#allocation4 + $0x78] sm:$0xff]
          %476 = vst [vmem:[#allocation2] sm:$0xff] %v460
          %477 = vst [vmem:[#allocation2 + $0x8] sm:$0xff] %v461
          %478 = vst [vmem:[#allocation2 + $0x10] sm:$0xff] %v462
          %479 = vst [vmem:[#allocation2 + $0x18] sm:$0xff] %v463
          %480 = vst [vmem:[#allocation2 + $0x20] sm:$0xff] %v464
          %481 = vst [vmem:[#allocation2 + $0x28] sm:$0xff] %v465
          %482 = vst [vmem:[#allocation2 + $0x30] sm:$0xff] %v466
          %483 = vst [vmem:[#allocation2 + $0x38] sm:$0xff] %v467
          %484 = vst [vmem:[#allocation2 + $0x40] sm:$0xff] %v468
          %485 = vst [vmem:[#allocation2 + $0x48] sm:$0xff] %v469
          %486 = vst [vmem:[#allocation2 + $0x50] sm:$0xff] %v470
          %487 = vst [vmem:[#allocation2 + $0x58] sm:$0xff] %v471
          %488 = vst [vmem:[#allocation2 + $0x60] sm:$0xff] %v472
          %489 = vst [vmem:[#allocation2 + $0x68] sm:$0xff] %v473
          %490 = vst [vmem:[#allocation2 + $0x70] sm:$0xff] %v474
          %491 = vst [vmem:[#allocation2 + $0x78] sm:$0xff] %v475
        $region96: #{tpu_custom_call.1} parent=63 // pred_fallthru
          _
        %v492 = vld [vmem:[#allocation2] sm:$0xff]
        %v493 = vld [vmem:[#allocation2 + $0x8] sm:$0xff]
        %v494 = vld [vmem:[#allocation2 + $0x10] sm:$0xff]
        %v495 = vld [vmem:[#allocation2 + $0x18] sm:$0xff]
        %v496 = vld [vmem:[#allocation2 + $0x20] sm:$0xff]
        %v497 = vld [vmem:[#allocation2 + $0x28] sm:$0xff]
        %v498 = vld [vmem:[#allocation2 + $0x30] sm:$0xff]
        %v499 = vld [vmem:[#allocation2 + $0x38] sm:$0xff]
        %v500 = vld [vmem:[#allocation2 + $0x40] sm:$0xff]
        %v501 = vld [vmem:[#allocation2 + $0x48] sm:$0xff]
        %v502 = vld [vmem:[#allocation2 + $0x50] sm:$0xff]
        %v503 = vld [vmem:[#allocation2 + $0x58] sm:$0xff]
        %v504 = vld [vmem:[#allocation2 + $0x60] sm:$0xff]
        %v505 = vld [vmem:[#allocation2 + $0x68] sm:$0xff]
        %v506 = vld [vmem:[#allocation2 + $0x70] sm:$0xff]
        %v507 = vld [vmem:[#allocation2 + $0x78] sm:$0xff]
        %v508 = vpack.c.bf16 %v493, %v492
        %v509 = vpack.c.bf16 %v495, %v494
        %v510 = vpack.c.bf16 %v497, %v496
        %v511 = vpack.c.bf16 %v499, %v498
        %v512 = vpack.c.bf16 %v501, %v500
        %v513 = vpack.c.bf16 %v503, %v502
        %v514 = vpack.c.bf16 %v505, %v504
        %v515 = vpack.c.bf16 %v507, %v506
        %v516 = vld [vmem:[#allocation7] sm:$0xf]
        %v517 = vld [vmem:[#allocation7 + $0x4] sm:$0xf]
        %v518 = vld [vmem:[#allocation7 + $0x8] sm:$0xf]
        %v519 = vld [vmem:[#allocation7 + $0xc] sm:$0xf]
        %v520 = vld [vmem:[#allocation7 + $0x10] sm:$0xf]
        %v521 = vld [vmem:[#allocation7 + $0x14] sm:$0xf]
        %v522 = vld [vmem:[#allocation7 + $0x18] sm:$0xf]
        %v523 = vld [vmem:[#allocation7 + $0x1c] sm:$0xf]
        %v524 = vld [vmem:[#allocation7 + $0x20] sm:$0xf]
        %v525 = vld [vmem:[#allocation7 + $0x24] sm:$0xf]
        %v526 = vld [vmem:[#allocation7 + $0x28] sm:$0xf]
        %v527 = vld [vmem:[#allocation7 + $0x2c] sm:$0xf]
        %v528 = vld [vmem:[#allocation7 + $0x30] sm:$0xf]
        %v529 = vld [vmem:[#allocation7 + $0x34] sm:$0xf]
        %v530 = vld [vmem:[#allocation7 + $0x38] sm:$0xf]
        %v531 = vld [vmem:[#allocation7 + $0x3c] sm:$0xf]
        %v548 = vunpack.c.l.b16 %v516
        %v549 = vunpack.c.l.b16 %v517
        %v550 = vunpack.c.l.b16 %v518
        %v551 = vunpack.c.l.b16 %v519
        %v552 = vunpack.c.l.b16 %v520
        %v553 = vunpack.c.l.b16 %v521
        %v554 = vunpack.c.l.b16 %v522
        %v555 = vunpack.c.l.b16 %v523
        %v556 = vunpack.c.l.b16 %v524
        %v557 = vunpack.c.l.b16 %v525
        %v558 = vunpack.c.l.b16 %v526
        %v559 = vunpack.c.l.b16 %v527
        %v560 = vunpack.c.l.b16 %v528
        %v561 = vunpack.c.l.b16 %v529
        %v562 = vunpack.c.l.b16 %v530
        %v563 = vunpack.c.l.b16 %v531
        %v564 = vpack.c.b16 %v549, %v548
        %v565 = vpack.c.b16 %v551, %v550
        %v566 = vpack.c.b16 %v553, %v552
        %v567 = vpack.c.b16 %v555, %v554
        %v568 = vpack.c.b16 %v557, %v556
        %v569 = vpack.c.b16 %v559, %v558
        %v570 = vpack.c.b16 %v561, %v560
        %v571 = vpack.c.b16 %v563, %v562
        %580 = vmatprep.subr.bf16.mxu0 0
        %581 = vmatpush1.bf16.msra.mxu0 %v515
        %582 = vmatprep.subr.bf16.mxu0 0
        %583 = vmatpush1.bf16.msra.mxu0 %v514
        %584 = vmatprep.subr.bf16.mxu0 0
        %585 = vmatpush1.bf16.msra.mxu0 %v513
        %586 = vmatprep.subr.bf16.mxu0 0
        %587 = vmatpush1.bf16.msra.mxu0 %v512
        %588 = vmatprep.subr.bf16.mxu0 0
        %589 = vmatpush1.bf16.msra.mxu0 %v511
        %590 = vmatprep.subr.bf16.mxu0 0
        %591 = vmatpush1.bf16.msra.mxu0 %v510
        %592 = vmatprep.subr.bf16.mxu0 0
        %593 = vmatpush1.bf16.msra.mxu0 %v509
        %594 = vmatprep.subr.bf16.mxu0 0
        %595 = vmatpush1.bf16.msra.mxu0 %v508
        %596 = vmatprep.subr.bf16.mxu0 0
        %597 = vmatpush2.bf16.msra.mxu0 0
        %598 = vmatprep.subr.bf16.mxu0 0
        %599 = vmatpush2.bf16.msra.mxu0 0
        %600 = vmatprep.subr.bf16.mxu0 0
        %601 = vmatpush2.bf16.msra.mxu0 0
        %602 = vmatprep.subr.bf16.mxu0 0
        %603 = vmatpush2.bf16.msra.mxu0 0
        %604 = vmatprep.subr.bf16.mxu0 0
        %605 = vmatpush2.bf16.msra.mxu0 0
        %606 = vmatprep.subr.bf16.mxu0 0
        %607 = vmatpush2.bf16.msra.mxu0 0
        %608 = vmatprep.subr.bf16.mxu0 0
        %609 = vmatpush2.bf16.msra.mxu0 0
        %610 = vmatprep.subr.bf16.mxu0 0
        %611 = vmatpush2.bf16.msra.mxu0 0
        %612 = vmatprep.mubr.bf16.mxu0 0
        %613 = vmatmul.mubr.bf16.gmra.mxu0 %v564
        %v614 = vpop.f32.mrf.mxu0
        %v615 = vadd.f32 0.0, %v614
        %v616 = vpop.f32.mrf.mxu0
        %v617 = vpop.f32.mrf.mxu0
        %v618 = vadd.f32 0.0, %v617
        %v619 = vpop.f32.mrf.mxu0
        %620 = vmatprep.mubr.bf16.mxu0 0
        %621 = vmatmul.mubr.bf16.gmra.mxu0 %v565
        %v622 = vpop.f32.mrf.mxu0
        %v623 = vadd.f32 0.0, %v622
        %v624 = vpop.f32.mrf.mxu0
        %v625 = vpop.f32.mrf.mxu0
        %v626 = vadd.f32 0.0, %v625
        %v627 = vpop.f32.mrf.mxu0
        %628 = vmatprep.mubr.bf16.mxu0 0
        %629 = vmatmul.mubr.bf16.gmra.mxu0 %v566
        %v630 = vpop.f32.mrf.mxu0
        %v631 = vadd.f32 0.0, %v630
        %v632 = vpop.f32.mrf.mxu0
        %v633 = vpop.f32.mrf.mxu0
        %v634 = vadd.f32 0.0, %v633
        %v635 = vpop.f32.mrf.mxu0
        %636 = vmatprep.mubr.bf16.mxu0 0
        %637 = vmatmul.mubr.bf16.gmra.mxu0 %v567
        %v638 = vpop.f32.mrf.mxu0
        %v639 = vadd.f32 0.0, %v638
        %v640 = vpop.f32.mrf.mxu0
        %v641 = vpop.f32.mrf.mxu0
        %v642 = vadd.f32 0.0, %v641
        %v643 = vpop.f32.mrf.mxu0
        %644 = vmatprep.mubr.bf16.mxu0 0
        %645 = vmatmul.mubr.bf16.gmra.mxu0 %v568
        %v646 = vpop.f32.mrf.mxu0
        %v647 = vadd.f32 0.0, %v646
        %v648 = vpop.f32.mrf.mxu0
        %v649 = vpop.f32.mrf.mxu0
        %v650 = vadd.f32 0.0, %v649
        %v651 = vpop.f32.mrf.mxu0
        %652 = vmatprep.mubr.bf16.mxu0 0
        %653 = vmatmul.mubr.bf16.gmra.mxu0 %v569
        %v654 = vpop.f32.mrf.mxu0
        %v655 = vadd.f32 0.0, %v654
        %v656 = vpop.f32.mrf.mxu0
        %v657 = vpop.f32.mrf.mxu0
        %v658 = vadd.f32 0.0, %v657
        %v659 = vpop.f32.mrf.mxu0
        %660 = vmatprep.mubr.bf16.mxu0 0
        %661 = vmatmul.mubr.bf16.gmra.mxu0 %v570
        %v662 = vpop.f32.mrf.mxu0
        %v663 = vadd.f32 0.0, %v662
        %v664 = vpop.f32.mrf.mxu0
        %v665 = vpop.f32.mrf.mxu0
        %v666 = vadd.f32 0.0, %v665
        %v667 = vpop.f32.mrf.mxu0
        %668 = vmatprep.mubr.bf16.mxu0 0
        %669 = vmatmul.mubr.bf16.gmra.mxu0 %v571
        %v670 = vpop.f32.mrf.mxu0
        %v671 = vadd.f32 0.0, %v670
        %v672 = vpop.f32.mrf.mxu0
        %v673 = vpop.f32.mrf.mxu0
        %v674 = vadd.f32 0.0, %v673
        %v675 = vpop.f32.mrf.mxu0
        %676 = vdwg.mxu0
        %v677 = vpack.c.bf16 %v618, %v615
        %v678 = vpack.c.bf16 %v626, %v623
        %v679 = vpack.c.bf16 %v634, %v631
        %v680 = vpack.c.bf16 %v642, %v639
        %v681 = vpack.c.bf16 %v650, %v647
        %v682 = vpack.c.bf16 %v658, %v655
        %v683 = vpack.c.bf16 %v666, %v663
        %v684 = vpack.c.bf16 %v674, %v671
        %s685 = smul.u32 %s27, 16
        %s686 = smul.addr %s685, 4
        %s687 = scalar_lea.vmem [#allocation10], %s686
        %v688 = vld [vmem:[%s687] sm:$0xf]
        %v689 = vld [vmem:[%s687 + $0x4] sm:$0xf]
        %v690 = vld [vmem:[%s687 + $0x8] sm:$0xf]
        %v691 = vld [vmem:[%s687 + $0xc] sm:$0xf]
        %v692 = vld [vmem:[%s687 + $0x10] sm:$0xf]
        %v693 = vld [vmem:[%s687 + $0x14] sm:$0xf]
        %v694 = vld [vmem:[%s687 + $0x18] sm:$0xf]
        %v695 = vld [vmem:[%s687 + $0x1c] sm:$0xf]
        %v696 = vld [vmem:[%s687 + $0x20] sm:$0xf]
        %v697 = vld [vmem:[%s687 + $0x24] sm:$0xf]
        %v698 = vld [vmem:[%s687 + $0x28] sm:$0xf]
        %v699 = vld [vmem:[%s687 + $0x2c] sm:$0xf]
        %v700 = vld [vmem:[%s687 + $0x30] sm:$0xf]
        %v701 = vld [vmem:[%s687 + $0x34] sm:$0xf]
        %v702 = vld [vmem:[%s687 + $0x38] sm:$0xf]
        %v703 = vld [vmem:[%s687 + $0x3c] sm:$0xf]
        %s704 = scalar_lea.vmem %s4, %s27
        %v705 = vld [vmem:[%s704] sm:$0x1]
        %v707 = vlaneseq
        %v708 = vshrl.u32 %v707, 7
        %v709 = vsub.s32 0, %v708
        %v710 = vrot.slane %v705, %v709
        %v728 = vunpack.c.l.b16 %v688
        %v729 = vunpack.c.l.b16 %v689
        %v730 = vunpack.c.l.b16 %v690
        %v731 = vunpack.c.l.b16 %v691
        %v732 = vunpack.c.l.b16 %v692
        %v733 = vunpack.c.l.b16 %v693
        %v734 = vunpack.c.l.b16 %v694
        %v735 = vunpack.c.l.b16 %v695
        %v736 = vunpack.c.l.b16 %v696
        %v737 = vunpack.c.l.b16 %v697
        %v738 = vunpack.c.l.b16 %v698
        %v739 = vunpack.c.l.b16 %v699
        %v740 = vunpack.c.l.b16 %v700
        %v741 = vunpack.c.l.b16 %v701
        %v742 = vunpack.c.l.b16 %v702
        %v743 = vunpack.c.l.b16 %v703
        %v744 = vpack.c.b16 %v729, %v728
        %v745 = vpack.c.b16 %v731, %v730
        %v746 = vpack.c.b16 %v733, %v732
        %v747 = vpack.c.b16 %v735, %v734
        %v748 = vpack.c.b16 %v737, %v736
        %v749 = vpack.c.b16 %v739, %v738
        %v750 = vpack.c.b16 %v741, %v740
        %v751 = vpack.c.b16 %v743, %v742
        %760 = vmatprep.subr.bf16.mxu0 0
        %761 = vmatpush1.bf16.msra.mxu0 %v751
        %762 = vmatprep.subr.bf16.mxu0 0
        %763 = vmatpush1.bf16.msra.mxu0 %v750
        %764 = vmatprep.subr.bf16.mxu0 0
        %765 = vmatpush1.bf16.msra.mxu0 %v749
        %766 = vmatprep.subr.bf16.mxu0 0
        %767 = vmatpush1.bf16.msra.mxu0 %v748
        %768 = vmatprep.subr.bf16.mxu0 0
        %769 = vmatpush1.bf16.msra.mxu0 %v747
        %770 = vmatprep.subr.bf16.mxu0 0
        %771 = vmatpush1.bf16.msra.mxu0 %v746
        %772 = vmatprep.subr.bf16.mxu0 0
        %773 = vmatpush1.bf16.msra.mxu0 %v745
        %774 = vmatprep.subr.bf16.mxu0 0
        %775 = vmatpush1.bf16.msra.mxu0 %v744
        %776 = vmatprep.subr.bf16.mxu0 0
        %777 = vmatpush2.bf16.msra.mxu0 0
        %778 = vmatprep.subr.bf16.mxu0 0
        %779 = vmatpush2.bf16.msra.mxu0 0
        %780 = vmatprep.subr.bf16.mxu0 0
        %781 = vmatpush2.bf16.msra.mxu0 0
        %782 = vmatprep.subr.bf16.mxu0 0
        %783 = vmatpush2.bf16.msra.mxu0 0
        %784 = vmatprep.subr.bf16.mxu0 0
        %785 = vmatpush2.bf16.msra.mxu0 0
        %786 = vmatprep.subr.bf16.mxu0 0
        %787 = vmatpush2.bf16.msra.mxu0 0
        %788 = vmatprep.subr.bf16.mxu0 0
        %789 = vmatpush2.bf16.msra.mxu0 0
        %790 = vmatprep.subr.bf16.mxu0 0
        %791 = vmatpush2.bf16.msra.mxu0 0
        %792 = vmatprep.mubr.bf16.mxu0 0
        %793 = vmatmul.mubr.bf16.gmra.mxu0 %v677
        %v794 = vpop.f32.mrf.mxu0
        %v795 = vadd.f32 %v710, %v794
        %v796 = vpop.f32.mrf.mxu0
        %v797 = vpop.f32.mrf.mxu0
        %v798 = vadd.f32 %v710, %v797
        %v799 = vpop.f32.mrf.mxu0
        %800 = vmatprep.mubr.bf16.mxu0 0
        %801 = vmatmul.mubr.bf16.gmra.mxu0 %v678
        %v802 = vpop.f32.mrf.mxu0
        %v803 = vadd.f32 %v710, %v802
        %v804 = vpop.f32.mrf.mxu0
        %v805 = vpop.f32.mrf.mxu0
        %v806 = vadd.f32 %v710, %v805
        %v807 = vpop.f32.mrf.mxu0
        %808 = vmatprep.mubr.bf16.mxu0 0
        %809 = vmatmul.mubr.bf16.gmra.mxu0 %v679
        %v810 = vpop.f32.mrf.mxu0
        %v811 = vadd.f32 %v710, %v810
        %v812 = vpop.f32.mrf.mxu0
        %v813 = vpop.f32.mrf.mxu0
        %v814 = vadd.f32 %v710, %v813
        %v815 = vpop.f32.mrf.mxu0
        %816 = vmatprep.mubr.bf16.mxu0 0
        %817 = vmatmul.mubr.bf16.gmra.mxu0 %v680
        %v818 = vpop.f32.mrf.mxu0
        %v819 = vadd.f32 %v710, %v818
        %v820 = vpop.f32.mrf.mxu0
        %v821 = vpop.f32.mrf.mxu0
        %v822 = vadd.f32 %v710, %v821
        %v823 = vpop.f32.mrf.mxu0
        %824 = vmatprep.mubr.bf16.mxu0 0
        %825 = vmatmul.mubr.bf16.gmra.mxu0 %v681
        %v826 = vpop.f32.mrf.mxu0
        %v827 = vadd.f32 %v710, %v826
        %v828 = vpop.f32.mrf.mxu0
        %v829 = vpop.f32.mrf.mxu0
        %v830 = vadd.f32 %v710, %v829
        %v831 = vpop.f32.mrf.mxu0
        %832 = vmatprep.mubr.bf16.mxu0 0
        %833 = vmatmul.mubr.bf16.gmra.mxu0 %v682
        %v834 = vpop.f32.mrf.mxu0
        %v835 = vadd.f32 %v710, %v834
        %v836 = vpop.f32.mrf.mxu0
        %v837 = vpop.f32.mrf.mxu0
        %v838 = vadd.f32 %v710, %v837
        %v839 = vpop.f32.mrf.mxu0
        %840 = vmatprep.mubr.bf16.mxu0 0
        %841 = vmatmul.mubr.bf16.gmra.mxu0 %v683
        %v842 = vpop.f32.mrf.mxu0
        %v843 = vadd.f32 %v710, %v842
        %v844 = vpop.f32.mrf.mxu0
        %v845 = vpop.f32.mrf.mxu0
        %v846 = vadd.f32 %v710, %v845
        %v847 = vpop.f32.mrf.mxu0
        %848 = vmatprep.mubr.bf16.mxu0 0
        %849 = vmatmul.mubr.bf16.gmra.mxu0 %v684
        %v850 = vpop.f32.mrf.mxu0
        %v851 = vadd.f32 %v710, %v850
        %v852 = vpop.f32.mrf.mxu0
        %v853 = vpop.f32.mrf.mxu0
        %v854 = vadd.f32 %v710, %v853
        %v855 = vpop.f32.mrf.mxu0
        %856 = vdwg.mxu0
        %v857 = vmax.f32 %v795, 0.0
        %v858 = vmax.f32 %v798, 0.0
        %v859 = vmax.f32 %v803, 0.0
        %v860 = vmax.f32 %v806, 0.0
        %v861 = vmax.f32 %v811, 0.0
        %v862 = vmax.f32 %v814, 0.0
        %v863 = vmax.f32 %v819, 0.0
        %v864 = vmax.f32 %v822, 0.0
        %v865 = vmax.f32 %v827, 0.0
        %v866 = vmax.f32 %v830, 0.0
        %v867 = vmax.f32 %v835, 0.0
        %v868 = vmax.f32 %v838, 0.0
        %v869 = vmax.f32 %v843, 0.0
        %v870 = vmax.f32 %v846, 0.0
        %v871 = vmax.f32 %v851, 0.0
        %v872 = vmax.f32 %v854, 0.0
        %v873 = vpack.c.bf16 %v858, %v857
        %v874 = vpack.c.bf16 %v860, %v859
        %v875 = vpack.c.bf16 %v862, %v861
        %v876 = vpack.c.bf16 %v864, %v863
        %v877 = vpack.c.bf16 %v866, %v865
        %v878 = vpack.c.bf16 %v868, %v867
        %v879 = vpack.c.bf16 %v870, %v869
        %v880 = vpack.c.bf16 %v872, %v871
        %s881 = smul.addr %s685, 4
        %s882 = scalar_lea.vmem [#allocation12], %s881
        %v883 = vld [vmem:[%s882] sm:$0xf]
        %v884 = vld [vmem:[%s882 + $0x4] sm:$0xf]
        %v885 = vld [vmem:[%s882 + $0x8] sm:$0xf]
        %v886 = vld [vmem:[%s882 + $0xc] sm:$0xf]
        %v887 = vld [vmem:[%s882 + $0x10] sm:$0xf]
        %v888 = vld [vmem:[%s882 + $0x14] sm:$0xf]
        %v889 = vld [vmem:[%s882 + $0x18] sm:$0xf]
        %v890 = vld [vmem:[%s882 + $0x1c] sm:$0xf]
        %v891 = vld [vmem:[%s882 + $0x20] sm:$0xf]
        %v892 = vld [vmem:[%s882 + $0x24] sm:$0xf]
        %v893 = vld [vmem:[%s882 + $0x28] sm:$0xf]
        %v894 = vld [vmem:[%s882 + $0x2c] sm:$0xf]
        %v895 = vld [vmem:[%s882 + $0x30] sm:$0xf]
        %v896 = vld [vmem:[%s882 + $0x34] sm:$0xf]
        %v897 = vld [vmem:[%s882 + $0x38] sm:$0xf]
        %v898 = vld [vmem:[%s882 + $0x3c] sm:$0xf]
        %s899 = scalar_lea.vmem %s6, %s27
        %v900 = vld [vmem:[%s899] sm:$0x1]
        %v902 = vlaneseq
        %v903 = vshrl.u32 %v902, 7
        %v904 = vsub.s32 0, %v903
        %v905 = vrot.slane %v900, %v904
        %v923 = vunpack.c.l.b16 %v883
        %v924 = vunpack.c.l.b16 %v884
        %v925 = vunpack.c.l.b16 %v885
        %v926 = vunpack.c.l.b16 %v886
        %v927 = vunpack.c.l.b16 %v887
        %v928 = vunpack.c.l.b16 %v888
        %v929 = vunpack.c.l.b16 %v889
        %v930 = vunpack.c.l.b16 %v890
        %v931 = vunpack.c.l.b16 %v891
        %v932 = vunpack.c.l.b16 %v892
        %v933 = vunpack.c.l.b16 %v893
        %v934 = vunpack.c.l.b16 %v894
        %v935 = vunpack.c.l.b16 %v895
        %v936 = vunpack.c.l.b16 %v896
        %v937 = vunpack.c.l.b16 %v897
        %v938 = vunpack.c.l.b16 %v898
        %v939 = vpack.c.b16 %v924, %v923
        %v940 = vpack.c.b16 %v926, %v925
        %v941 = vpack.c.b16 %v928, %v927
        %v942 = vpack.c.b16 %v930, %v929
        %v943 = vpack.c.b16 %v932, %v931
        %v944 = vpack.c.b16 %v934, %v933
        %v945 = vpack.c.b16 %v936, %v935
        %v946 = vpack.c.b16 %v938, %v937
        %955 = vmatprep.subr.bf16.mxu0 0
        %956 = vmatpush1.bf16.msra.mxu0 %v946
        %957 = vmatprep.subr.bf16.mxu0 0
        %958 = vmatpush1.bf16.msra.mxu0 %v945
        %959 = vmatprep.subr.bf16.mxu0 0
        %960 = vmatpush1.bf16.msra.mxu0 %v944
        %961 = vmatprep.subr.bf16.mxu0 0
        %962 = vmatpush1.bf16.msra.mxu0 %v943
        %963 = vmatprep.subr.bf16.mxu0 0
        %964 = vmatpush1.bf16.msra.mxu0 %v942
        %965 = vmatprep.subr.bf16.mxu0 0
        %966 = vmatpush1.bf16.msra.mxu0 %v941
        %967 = vmatprep.subr.bf16.mxu0 0
        %968 = vmatpush1.bf16.msra.mxu0 %v940
        %969 = vmatprep.subr.bf16.mxu0 0
        %970 = vmatpush1.bf16.msra.mxu0 %v939
        %971 = vmatprep.subr.bf16.mxu0 0
        %972 = vmatpush2.bf16.msra.mxu0 0
        %973 = vmatprep.subr.bf16.mxu0 0
        %974 = vmatpush2.bf16.msra.mxu0 0
        %975 = vmatprep.subr.bf16.mxu0 0
        %976 = vmatpush2.bf16.msra.mxu0 0
        %977 = vmatprep.subr.bf16.mxu0 0
        %978 = vmatpush2.bf16.msra.mxu0 0
        %979 = vmatprep.subr.bf16.mxu0 0
        %980 = vmatpush2.bf16.msra.mxu0 0
        %981 = vmatprep.subr.bf16.mxu0 0
        %982 = vmatpush2.bf16.msra.mxu0 0
        %983 = vmatprep.subr.bf16.mxu0 0
        %984 = vmatpush2.bf16.msra.mxu0 0
        %985 = vmatprep.subr.bf16.mxu0 0
        %986 = vmatpush2.bf16.msra.mxu0 0
        %987 = vmatprep.mubr.bf16.mxu0 0
        %988 = vmatmul.mubr.bf16.gmra.mxu0 %v873
        %v989 = vpop.f32.mrf.mxu0
        %v990 = vadd.f32 %v905, %v989
        %v991 = vpop.f32.mrf.mxu0
        %v992 = vpop.f32.mrf.mxu0
        %v993 = vadd.f32 %v905, %v992
        %v994 = vpop.f32.mrf.mxu0
        %995 = vmatprep.mubr.bf16.mxu0 0
        %996 = vmatmul.mubr.bf16.gmra.mxu0 %v874
        %v997 = vpop.f32.mrf.mxu0
        %v998 = vadd.f32 %v905, %v997
        %v999 = vpop.f32.mrf.mxu0
        %v1000 = vpop.f32.mrf.mxu0
        %v1001 = vadd.f32 %v905, %v1000
        %v1002 = vpop.f32.mrf.mxu0
        %1003 = vmatprep.mubr.bf16.mxu0 0
        %1004 = vmatmul.mubr.bf16.gmra.mxu0 %v875
        %v1005 = vpop.f32.mrf.mxu0
        %v1006 = vadd.f32 %v905, %v1005
        %v1007 = vpop.f32.mrf.mxu0
        %v1008 = vpop.f32.mrf.mxu0
        %v1009 = vadd.f32 %v905, %v1008
        %v1010 = vpop.f32.mrf.mxu0
        %1011 = vmatprep.mubr.bf16.mxu0 0
        %1012 = vmatmul.mubr.bf16.gmra.mxu0 %v876
        %v1013 = vpop.f32.mrf.mxu0
        %v1014 = vadd.f32 %v905, %v1013
        %v1015 = vpop.f32.mrf.mxu0
        %v1016 = vpop.f32.mrf.mxu0
        %v1017 = vadd.f32 %v905, %v1016
        %v1018 = vpop.f32.mrf.mxu0
        %1019 = vmatprep.mubr.bf16.mxu0 0
        %1020 = vmatmul.mubr.bf16.gmra.mxu0 %v877
        %v1021 = vpop.f32.mrf.mxu0
        %v1022 = vadd.f32 %v905, %v1021
        %v1023 = vpop.f32.mrf.mxu0
        %v1024 = vpop.f32.mrf.mxu0
        %v1025 = vadd.f32 %v905, %v1024
        %v1026 = vpop.f32.mrf.mxu0
        %1027 = vmatprep.mubr.bf16.mxu0 0
        %1028 = vmatmul.mubr.bf16.gmra.mxu0 %v878
        %v1029 = vpop.f32.mrf.mxu0
        %v1030 = vadd.f32 %v905, %v1029
        %v1031 = vpop.f32.mrf.mxu0
        %v1032 = vpop.f32.mrf.mxu0
        %v1033 = vadd.f32 %v905, %v1032
        %v1034 = vpop.f32.mrf.mxu0
        %1035 = vmatprep.mubr.bf16.mxu0 0
        %1036 = vmatmul.mubr.bf16.gmra.mxu0 %v879
        %v1037 = vpop.f32.mrf.mxu0
        %v1038 = vadd.f32 %v905, %v1037
        %v1039 = vpop.f32.mrf.mxu0
        %v1040 = vpop.f32.mrf.mxu0
        %v1041 = vadd.f32 %v905, %v1040
        %v1042 = vpop.f32.mrf.mxu0
        %1043 = vmatprep.mubr.bf16.mxu0 0
        %1044 = vmatmul.mubr.bf16.gmra.mxu0 %v880
        %v1045 = vpop.f32.mrf.mxu0
        %v1046 = vadd.f32 %v905, %v1045
        %v1047 = vpop.f32.mrf.mxu0
        %v1048 = vpop.f32.mrf.mxu0
        %v1049 = vadd.f32 %v905, %v1048
        %v1050 = vpop.f32.mrf.mxu0
        %1051 = vdwg.mxu0
        %v1052 = vld [vmem:[#allocation9] sm:$0xf]
        %v1053 = vld [vmem:[#allocation9 + $0x4] sm:$0xf]
        %v1054 = vld [vmem:[#allocation9 + $0x8] sm:$0xf]
        %v1055 = vld [vmem:[#allocation9 + $0xc] sm:$0xf]
        %v1056 = vld [vmem:[#allocation9 + $0x10] sm:$0xf]
        %v1057 = vld [vmem:[#allocation9 + $0x14] sm:$0xf]
        %v1058 = vld [vmem:[#allocation9 + $0x18] sm:$0xf]
        %v1059 = vld [vmem:[#allocation9 + $0x1c] sm:$0xf]
        %v1060 = vld [vmem:[#allocation9 + $0x20] sm:$0xf]
        %v1061 = vld [vmem:[#allocation9 + $0x24] sm:$0xf]
        %v1062 = vld [vmem:[#allocation9 + $0x28] sm:$0xf]
        %v1063 = vld [vmem:[#allocation9 + $0x2c] sm:$0xf]
        %v1064 = vld [vmem:[#allocation9 + $0x30] sm:$0xf]
        %v1065 = vld [vmem:[#allocation9 + $0x34] sm:$0xf]
        %v1066 = vld [vmem:[#allocation9 + $0x38] sm:$0xf]
        %v1067 = vld [vmem:[#allocation9 + $0x3c] sm:$0xf]
        %v1068 = vpack.c.bf16 %v993, %v990
        %v1069 = vpack.c.bf16 %v1001, %v998
        %v1070 = vpack.c.bf16 %v1009, %v1006
        %v1071 = vpack.c.bf16 %v1017, %v1014
        %v1072 = vpack.c.bf16 %v1025, %v1022
        %v1073 = vpack.c.bf16 %v1033, %v1030
        %v1074 = vpack.c.bf16 %v1041, %v1038
        %v1075 = vpack.c.bf16 %v1049, %v1046
        %v1092 = vunpack.c.l.b16 %v1052
        %v1093 = vunpack.c.l.b16 %v1053
        %v1094 = vunpack.c.l.b16 %v1054
        %v1095 = vunpack.c.l.b16 %v1055
        %v1096 = vunpack.c.l.b16 %v1056
        %v1097 = vunpack.c.l.b16 %v1057
        %v1098 = vunpack.c.l.b16 %v1058
        %v1099 = vunpack.c.l.b16 %v1059
        %v1100 = vunpack.c.l.b16 %v1060
        %v1101 = vunpack.c.l.b16 %v1061
        %v1102 = vunpack.c.l.b16 %v1062
        %v1103 = vunpack.c.l.b16 %v1063
        %v1104 = vunpack.c.l.b16 %v1064
        %v1105 = vunpack.c.l.b16 %v1065
        %v1106 = vunpack.c.l.b16 %v1066
        %v1107 = vunpack.c.l.b16 %v1067
        %v1108 = vpack.c.b16 %v1093, %v1092
        %v1109 = vpack.c.b16 %v1095, %v1094
        %v1110 = vpack.c.b16 %v1097, %v1096
        %v1111 = vpack.c.b16 %v1099, %v1098
        %v1112 = vpack.c.b16 %v1101, %v1100
        %v1113 = vpack.c.b16 %v1103, %v1102
        %v1114 = vpack.c.b16 %v1105, %v1104
        %v1115 = vpack.c.b16 %v1107, %v1106
        %1124 = vmatprep.subr.bf16.mxu0 0
        %1125 = vmatpush1.bf16.msra.mxu0 %v1075
        %1126 = vmatprep.subr.bf16.mxu0 0
        %1127 = vmatpush1.bf16.msra.mxu0 %v1074
        %1128 = vmatprep.subr.bf16.mxu0 0
        %1129 = vmatpush1.bf16.msra.mxu0 %v1073
        %1130 = vmatprep.subr.bf16.mxu0 0
        %1131 = vmatpush1.bf16.msra.mxu0 %v1072
        %1132 = vmatprep.subr.bf16.mxu0 0
        %1133 = vmatpush1.bf16.msra.mxu0 %v1071
        %1134 = vmatprep.subr.bf16.mxu0 0
        %1135 = vmatpush1.bf16.msra.mxu0 %v1070
        %1136 = vmatprep.subr.bf16.mxu0 0
        %1137 = vmatpush1.bf16.msra.mxu0 %v1069
        %1138 = vmatprep.subr.bf16.mxu0 0
        %1139 = vmatpush1.bf16.msra.mxu0 %v1068
        %1140 = vmatprep.subr.bf16.mxu0 0
        %1141 = vmatpush2.bf16.msra.mxu0 0
        %1142 = vmatprep.subr.bf16.mxu0 0
        %1143 = vmatpush2.bf16.msra.mxu0 0
        %1144 = vmatprep.subr.bf16.mxu0 0
        %1145 = vmatpush2.bf16.msra.mxu0 0
        %1146 = vmatprep.subr.bf16.mxu0 0
        %1147 = vmatpush2.bf16.msra.mxu0 0
        %1148 = vmatprep.subr.bf16.mxu0 0
        %1149 = vmatpush2.bf16.msra.mxu0 0
        %1150 = vmatprep.subr.bf16.mxu0 0
        %1151 = vmatpush2.bf16.msra.mxu0 0
        %1152 = vmatprep.subr.bf16.mxu0 0
        %1153 = vmatpush2.bf16.msra.mxu0 0
        %1154 = vmatprep.subr.bf16.mxu0 0
        %1155 = vmatpush2.bf16.msra.mxu0 0
        %1156 = vmatprep.mubr.bf16.mxu0 0
        %1157 = vmatmul.mubr.bf16.gmra.mxu0 %v1108
        %v1158 = vpop.f32.mrf.mxu0
        %v1159 = vadd.f32 0.0, %v1158
        %v1160 = vpop.f32.mrf.mxu0
        %v1161 = vpop.f32.mrf.mxu0
        %v1162 = vadd.f32 0.0, %v1161
        %v1163 = vpop.f32.mrf.mxu0
        %1164 = vmatprep.mubr.bf16.mxu0 0
        %1165 = vmatmul.mubr.bf16.gmra.mxu0 %v1109
        %v1166 = vpop.f32.mrf.mxu0
        %v1167 = vadd.f32 0.0, %v1166
        %v1168 = vpop.f32.mrf.mxu0
        %v1169 = vpop.f32.mrf.mxu0
        %v1170 = vadd.f32 0.0, %v1169
        %v1171 = vpop.f32.mrf.mxu0
        %1172 = vmatprep.mubr.bf16.mxu0 0
        %1173 = vmatmul.mubr.bf16.gmra.mxu0 %v1110
        %v1174 = vpop.f32.mrf.mxu0
        %v1175 = vadd.f32 0.0, %v1174
        %v1176 = vpop.f32.mrf.mxu0
        %v1177 = vpop.f32.mrf.mxu0
        %v1178 = vadd.f32 0.0, %v1177
        %v1179 = vpop.f32.mrf.mxu0
        %1180 = vmatprep.mubr.bf16.mxu0 0
        %1181 = vmatmul.mubr.bf16.gmra.mxu0 %v1111
        %v1182 = vpop.f32.mrf.mxu0
        %v1183 = vadd.f32 0.0, %v1182
        %v1184 = vpop.f32.mrf.mxu0
        %v1185 = vpop.f32.mrf.mxu0
        %v1186 = vadd.f32 0.0, %v1185
        %v1187 = vpop.f32.mrf.mxu0
        %1188 = vmatprep.mubr.bf16.mxu0 0
        %1189 = vmatmul.mubr.bf16.gmra.mxu0 %v1112
        %v1190 = vpop.f32.mrf.mxu0
        %v1191 = vadd.f32 0.0, %v1190
        %v1192 = vpop.f32.mrf.mxu0
        %v1193 = vpop.f32.mrf.mxu0
        %v1194 = vadd.f32 0.0, %v1193
        %v1195 = vpop.f32.mrf.mxu0
        %1196 = vmatprep.mubr.bf16.mxu0 0
        %1197 = vmatmul.mubr.bf16.gmra.mxu0 %v1113
        %v1198 = vpop.f32.mrf.mxu0
        %v1199 = vadd.f32 0.0, %v1198
        %v1200 = vpop.f32.mrf.mxu0
        %v1201 = vpop.f32.mrf.mxu0
        %v1202 = vadd.f32 0.0, %v1201
        %v1203 = vpop.f32.mrf.mxu0
        %1204 = vmatprep.mubr.bf16.mxu0 0
        %1205 = vmatmul.mubr.bf16.gmra.mxu0 %v1114
        %v1206 = vpop.f32.mrf.mxu0
        %v1207 = vadd.f32 0.0, %v1206
        %v1208 = vpop.f32.mrf.mxu0
        %v1209 = vpop.f32.mrf.mxu0
        %v1210 = vadd.f32 0.0, %v1209
        %v1211 = vpop.f32.mrf.mxu0
        %1212 = vmatprep.mubr.bf16.mxu0 0
        %1213 = vmatmul.mubr.bf16.gmra.mxu0 %v1115
        %v1214 = vpop.f32.mrf.mxu0
        %v1215 = vadd.f32 0.0, %v1214
        %v1216 = vpop.f32.mrf.mxu0
        %v1217 = vpop.f32.mrf.mxu0
        %v1218 = vadd.f32 0.0, %v1217
        %v1219 = vpop.f32.mrf.mxu0
        %1220 = vdwg.mxu0
        %v1229 = vunpack.c.l.b16 %v508
        %v1230 = vunpack.c.h.b16 %v508
        %v1231 = vunpack.c.l.b16 %v509
        %v1232 = vunpack.c.h.b16 %v509
        %v1233 = vunpack.c.l.b16 %v510
        %v1234 = vunpack.c.h.b16 %v510
        %v1235 = vunpack.c.l.b16 %v511
        %v1236 = vunpack.c.h.b16 %v511
        %v1237 = vunpack.c.l.b16 %v512
        %v1238 = vunpack.c.h.b16 %v512
        %v1239 = vunpack.c.l.b16 %v513
        %v1240 = vunpack.c.h.b16 %v513
        %v1241 = vunpack.c.l.b16 %v514
        %v1242 = vunpack.c.h.b16 %v514
        %v1243 = vunpack.c.l.b16 %v515
        %v1244 = vunpack.c.h.b16 %v515
        %v1245 = vpack.c.b16 %v1229, %v1229
        %v1246 = vpack.c.b16 %v1230, %v1230
        %v1247 = vpack.c.b16 %v1231, %v1231
        %v1248 = vpack.c.b16 %v1232, %v1232
        %v1249 = vpack.c.b16 %v1233, %v1233
        %v1250 = vpack.c.b16 %v1234, %v1234
        %v1251 = vpack.c.b16 %v1235, %v1235
        %v1252 = vpack.c.b16 %v1236, %v1236
        %v1253 = vpack.c.b16 %v1237, %v1237
        %v1254 = vpack.c.b16 %v1238, %v1238
        %v1255 = vpack.c.b16 %v1239, %v1239
        %v1256 = vpack.c.b16 %v1240, %v1240
        %v1257 = vpack.c.b16 %v1241, %v1241
        %v1258 = vpack.c.b16 %v1242, %v1242
        %v1259 = vpack.c.b16 %v1243, %v1243
        %v1260 = vpack.c.b16 %v1244, %v1244
        %1277 = vst [vmem:[#allocation3] sm:$0xf] %v1245
        %1278 = vst [vmem:[#allocation3 + $0x8] sm:$0xf] %v1246
        %1279 = vst [vmem:[#allocation3 + $0x10] sm:$0xf] %v1247
        %1280 = vst [vmem:[#allocation3 + $0x18] sm:$0xf] %v1248
        %1281 = vst [vmem:[#allocation3 + $0x20] sm:$0xf] %v1249
        %1282 = vst [vmem:[#allocation3 + $0x28] sm:$0xf] %v1250
        %1283 = vst [vmem:[#allocation3 + $0x30] sm:$0xf] %v1251
        %1284 = vst [vmem:[#allocation3 + $0x38] sm:$0xf] %v1252
        %1285 = vst [vmem:[#allocation3 + $0x40] sm:$0xf] %v1253
        %1286 = vst [vmem:[#allocation3 + $0x48] sm:$0xf] %v1254
        %1287 = vst [vmem:[#allocation3 + $0x50] sm:$0xf] %v1255
        %1288 = vst [vmem:[#allocation3 + $0x58] sm:$0xf] %v1256
        %1289 = vst [vmem:[#allocation3 + $0x60] sm:$0xf] %v1257
        %1290 = vst [vmem:[#allocation3 + $0x68] sm:$0xf] %v1258
        %1291 = vst [vmem:[#allocation3 + $0x70] sm:$0xf] %v1259
        %1292 = vst [vmem:[#allocation3 + $0x78] sm:$0xf] %v1260
        %v1293 = vpack.c.bf16 %v1162, %v1159
        %v1294 = vpack.c.bf16 %v1170, %v1167
        %v1295 = vpack.c.bf16 %v1178, %v1175
        %v1296 = vpack.c.bf16 %v1186, %v1183
        %v1297 = vpack.c.bf16 %v1194, %v1191
        %v1298 = vpack.c.bf16 %v1202, %v1199
        %v1299 = vpack.c.bf16 %v1210, %v1207
        %v1300 = vpack.c.bf16 %v1218, %v1215
        %v1309 = vunpack.c.l.b16 %v1293
        %v1310 = vunpack.c.h.b16 %v1293
        %v1311 = vunpack.c.l.b16 %v1294
        %v1312 = vunpack.c.h.b16 %v1294
        %v1313 = vunpack.c.l.b16 %v1295
        %v1314 = vunpack.c.h.b16 %v1295
        %v1315 = vunpack.c.l.b16 %v1296
        %v1316 = vunpack.c.h.b16 %v1296
        %v1317 = vunpack.c.l.b16 %v1297
        %v1318 = vunpack.c.h.b16 %v1297
        %v1319 = vunpack.c.l.b16 %v1298
        %v1320 = vunpack.c.h.b16 %v1298
        %v1321 = vunpack.c.l.b16 %v1299
        %v1322 = vunpack.c.h.b16 %v1299
        %v1323 = vunpack.c.l.b16 %v1300
        %v1324 = vunpack.c.h.b16 %v1300
        %v1325 = vpack.c.b16 %v1309, %v1309
        %v1326 = vpack.c.b16 %v1310, %v1310
        %v1327 = vpack.c.b16 %v1311, %v1311
        %v1328 = vpack.c.b16 %v1312, %v1312
        %v1329 = vpack.c.b16 %v1313, %v1313
        %v1330 = vpack.c.b16 %v1314, %v1314
        %v1331 = vpack.c.b16 %v1315, %v1315
        %v1332 = vpack.c.b16 %v1316, %v1316
        %v1333 = vpack.c.b16 %v1317, %v1317
        %v1334 = vpack.c.b16 %v1318, %v1318
        %v1335 = vpack.c.b16 %v1319, %v1319
        %v1336 = vpack.c.b16 %v1320, %v1320
        %v1337 = vpack.c.b16 %v1321, %v1321
        %v1338 = vpack.c.b16 %v1322, %v1322
        %v1339 = vpack.c.b16 %v1323, %v1323
        %v1340 = vpack.c.b16 %v1324, %v1324
        %1357 = vst [vmem:[#allocation3 + $0x4] sm:$0xf] %v1325
        %1358 = vst [vmem:[#allocation3 + $0xc] sm:$0xf] %v1326
        %1359 = vst [vmem:[#allocation3 + $0x14] sm:$0xf] %v1327
        %1360 = vst [vmem:[#allocation3 + $0x1c] sm:$0xf] %v1328
        %1361 = vst [vmem:[#allocation3 + $0x24] sm:$0xf] %v1329
        %1362 = vst [vmem:[#allocation3 + $0x2c] sm:$0xf] %v1330
        %1363 = vst [vmem:[#allocation3 + $0x34] sm:$0xf] %v1331
        %1364 = vst [vmem:[#allocation3 + $0x3c] sm:$0xf] %v1332
        %1365 = vst [vmem:[#allocation3 + $0x44] sm:$0xf] %v1333
        %1366 = vst [vmem:[#allocation3 + $0x4c] sm:$0xf] %v1334
        %1367 = vst [vmem:[#allocation3 + $0x54] sm:$0xf] %v1335
        %1368 = vst [vmem:[#allocation3 + $0x5c] sm:$0xf] %v1336
        %1369 = vst [vmem:[#allocation3 + $0x64] sm:$0xf] %v1337
        %1370 = vst [vmem:[#allocation3 + $0x6c] sm:$0xf] %v1338
        %1371 = vst [vmem:[#allocation3 + $0x74] sm:$0xf] %v1339
        %1372 = vst [vmem:[#allocation3 + $0x7c] sm:$0xf] %v1340
        %v1373 = vld [vmem:[#allocation3] sm:$0xff]
        %v1374 = vld [vmem:[#allocation3 + $0x8] sm:$0xff]
        %v1375 = vld [vmem:[#allocation3 + $0x10] sm:$0xff]
        %v1376 = vld [vmem:[#allocation3 + $0x18] sm:$0xff]
        %v1377 = vld [vmem:[#allocation3 + $0x20] sm:$0xff]
        %v1378 = vld [vmem:[#allocation3 + $0x28] sm:$0xff]
        %v1379 = vld [vmem:[#allocation3 + $0x30] sm:$0xff]
        %v1380 = vld [vmem:[#allocation3 + $0x38] sm:$0xff]
        %v1381 = vld [vmem:[#allocation3 + $0x40] sm:$0xff]
        %v1382 = vld [vmem:[#allocation3 + $0x48] sm:$0xff]
        %v1383 = vld [vmem:[#allocation3 + $0x50] sm:$0xff]
        %v1384 = vld [vmem:[#allocation3 + $0x58] sm:$0xff]
        %v1385 = vld [vmem:[#allocation3 + $0x60] sm:$0xff]
        %v1386 = vld [vmem:[#allocation3 + $0x68] sm:$0xff]
        %v1387 = vld [vmem:[#allocation3 + $0x70] sm:$0xff]
        %v1388 = vld [vmem:[#allocation3 + $0x78] sm:$0xff]
        %s1389 = smul.u32 %s27, 32
        %s1390 = smul.addr %s1389, 4
        %s1391 = scalar_lea.vmem [#allocation13], %s1390
        %v1392 = vld [vmem:[%s1391] sm:$0xf]
        %v1393 = vld [vmem:[%s1391 + $0x4] sm:$0xf]
        %v1394 = vld [vmem:[%s1391 + $0x8] sm:$0xf]
        %v1395 = vld [vmem:[%s1391 + $0xc] sm:$0xf]
        %v1396 = vld [vmem:[%s1391 + $0x10] sm:$0xf]
        %v1397 = vld [vmem:[%s1391 + $0x14] sm:$0xf]
        %v1398 = vld [vmem:[%s1391 + $0x18] sm:$0xf]
        %v1399 = vld [vmem:[%s1391 + $0x1c] sm:$0xf]
        %v1400 = vld [vmem:[%s1391 + $0x20] sm:$0xf]
        %v1401 = vld [vmem:[%s1391 + $0x24] sm:$0xf]
        %v1402 = vld [vmem:[%s1391 + $0x28] sm:$0xf]
        %v1403 = vld [vmem:[%s1391 + $0x2c] sm:$0xf]
        %v1404 = vld [vmem:[%s1391 + $0x30] sm:$0xf]
        %v1405 = vld [vmem:[%s1391 + $0x34] sm:$0xf]
        %v1406 = vld [vmem:[%s1391 + $0x38] sm:$0xf]
        %v1407 = vld [vmem:[%s1391 + $0x3c] sm:$0xf]
        %v1408 = vld [vmem:[%s1391 + $0x40] sm:$0xf]
        %v1409 = vld [vmem:[%s1391 + $0x44] sm:$0xf]
        %v1410 = vld [vmem:[%s1391 + $0x48] sm:$0xf]
        %v1411 = vld [vmem:[%s1391 + $0x4c] sm:$0xf]
        %v1412 = vld [vmem:[%s1391 + $0x50] sm:$0xf]
        %v1413 = vld [vmem:[%s1391 + $0x54] sm:$0xf]
        %v1414 = vld [vmem:[%s1391 + $0x58] sm:$0xf]
        %v1415 = vld [vmem:[%s1391 + $0x5c] sm:$0xf]
        %v1416 = vld [vmem:[%s1391 + $0x60] sm:$0xf]
        %v1417 = vld [vmem:[%s1391 + $0x64] sm:$0xf]
        %v1418 = vld [vmem:[%s1391 + $0x68] sm:$0xf]
        %v1419 = vld [vmem:[%s1391 + $0x6c] sm:$0xf]
        %v1420 = vld [vmem:[%s1391 + $0x70] sm:$0xf]
        %v1421 = vld [vmem:[%s1391 + $0x74] sm:$0xf]
        %v1422 = vld [vmem:[%s1391 + $0x78] sm:$0xf]
        %v1423 = vld [vmem:[%s1391 + $0x7c] sm:$0xf]
        %s1424 = scalar_lea.vmem %s8, %s27
        %v1425 = vld [vmem:[%s1424] sm:$0x1]
        %v1427 = vlaneseq
        %v1428 = vshrl.u32 %v1427, 7
        %v1429 = vsub.s32 0, %v1428
        %v1430 = vrot.slane %v1425, %v1429
        %v1448 = vunpack.c.l.b16 %v1373
        %v1449 = vunpack.c.h.b16 %v1373
        %v1450 = vunpack.c.l.b16 %v1374
        %v1451 = vunpack.c.h.b16 %v1374
        %v1452 = vunpack.c.l.b16 %v1375
        %v1453 = vunpack.c.h.b16 %v1375
        %v1454 = vunpack.c.l.b16 %v1376
        %v1455 = vunpack.c.h.b16 %v1376
        %v1456 = vunpack.c.l.b16 %v1377
        %v1457 = vunpack.c.h.b16 %v1377
        %v1458 = vunpack.c.l.b16 %v1378
        %v1459 = vunpack.c.h.b16 %v1378
        %v1460 = vunpack.c.l.b16 %v1379
        %v1461 = vunpack.c.h.b16 %v1379
        %v1462 = vunpack.c.l.b16 %v1380
        %v1463 = vunpack.c.h.b16 %v1380
        %v1464 = vunpack.c.l.b16 %v1381
        %v1465 = vunpack.c.h.b16 %v1381
        %v1466 = vunpack.c.l.b16 %v1382
        %v1467 = vunpack.c.h.b16 %v1382
        %v1468 = vunpack.c.l.b16 %v1383
        %v1469 = vunpack.c.h.b16 %v1383
        %v1470 = vunpack.c.l.b16 %v1384
        %v1471 = vunpack.c.h.b16 %v1384
        %v1472 = vunpack.c.l.b16 %v1385
        %v1473 = vunpack.c.h.b16 %v1385
        %v1474 = vunpack.c.l.b16 %v1386
        %v1475 = vunpack.c.h.b16 %v1386
        %v1476 = vunpack.c.l.b16 %v1387
        %v1477 = vunpack.c.h.b16 %v1387
        %v1478 = vunpack.c.l.b16 %v1388
        %v1479 = vunpack.c.h.b16 %v1388
        %v1480 = vpack.c.b16 %v1450, %v1448
        %v1481 = vpack.c.b16 %v1451, %v1449
        %v1482 = vpack.c.b16 %v1454, %v1452
        %v1483 = vpack.c.b16 %v1455, %v1453
        %v1484 = vpack.c.b16 %v1458, %v1456
        %v1485 = vpack.c.b16 %v1459, %v1457
        %v1486 = vpack.c.b16 %v1462, %v1460
        %v1487 = vpack.c.b16 %v1463, %v1461
        %v1488 = vpack.c.b16 %v1466, %v1464
        %v1489 = vpack.c.b16 %v1467, %v1465
        %v1490 = vpack.c.b16 %v1470, %v1468
        %v1491 = vpack.c.b16 %v1471, %v1469
        %v1492 = vpack.c.b16 %v1474, %v1472
        %v1493 = vpack.c.b16 %v1475, %v1473
        %v1494 = vpack.c.b16 %v1478, %v1476
        %v1495 = vpack.c.b16 %v1479, %v1477
        %v1544 = vunpack.c.l.b16 %v1392
        %v1545 = vunpack.c.l.b16 %v1393
        %v1546 = vunpack.c.l.b16 %v1394
        %v1547 = vunpack.c.l.b16 %v1395
        %v1548 = vunpack.c.l.b16 %v1396
        %v1549 = vunpack.c.l.b16 %v1397
        %v1550 = vunpack.c.l.b16 %v1398
        %v1551 = vunpack.c.l.b16 %v1399
        %v1552 = vunpack.c.l.b16 %v1400
        %v1553 = vunpack.c.l.b16 %v1401
        %v1554 = vunpack.c.l.b16 %v1402
        %v1555 = vunpack.c.l.b16 %v1403
        %v1556 = vunpack.c.l.b16 %v1404
        %v1557 = vunpack.c.l.b16 %v1405
        %v1558 = vunpack.c.l.b16 %v1406
        %v1559 = vunpack.c.l.b16 %v1407
        %v1560 = vunpack.c.l.b16 %v1408
        %v1561 = vunpack.c.l.b16 %v1409
        %v1562 = vunpack.c.l.b16 %v1410
        %v1563 = vunpack.c.l.b16 %v1411
        %v1564 = vunpack.c.l.b16 %v1412
        %v1565 = vunpack.c.l.b16 %v1413
        %v1566 = vunpack.c.l.b16 %v1414
        %v1567 = vunpack.c.l.b16 %v1415
        %v1568 = vunpack.c.l.b16 %v1416
        %v1569 = vunpack.c.l.b16 %v1417
        %v1570 = vunpack.c.l.b16 %v1418
        %v1571 = vunpack.c.l.b16 %v1419
        %v1572 = vunpack.c.l.b16 %v1420
        %v1573 = vunpack.c.l.b16 %v1421
        %v1574 = vunpack.c.l.b16 %v1422
        %v1575 = vunpack.c.l.b16 %v1423
        %v1576 = vpack.c.b16 %v1545, %v1544
        %v1577 = vpack.c.b16 %v1547, %v1546
        %v1578 = vpack.c.b16 %v1549, %v1548
        %v1579 = vpack.c.b16 %v1551, %v1550
        %v1580 = vpack.c.b16 %v1553, %v1552
        %v1581 = vpack.c.b16 %v1555, %v1554
        %v1582 = vpack.c.b16 %v1557, %v1556
        %v1583 = vpack.c.b16 %v1559, %v1558
        %v1584 = vpack.c.b16 %v1561, %v1560
        %v1585 = vpack.c.b16 %v1563, %v1562
        %v1586 = vpack.c.b16 %v1565, %v1564
        %v1587 = vpack.c.b16 %v1567, %v1566
        %v1588 = vpack.c.b16 %v1569, %v1568
        %v1589 = vpack.c.b16 %v1571, %v1570
        %v1590 = vpack.c.b16 %v1573, %v1572
        %v1591 = vpack.c.b16 %v1575, %v1574
        %1608 = vmatprep.subr.bf16.mxu0 0
        %1609 = vmatpush1.bf16.msra.mxu0 %v1583
        %1610 = vmatprep.subr.bf16.mxu0 0
        %1611 = vmatpush1.bf16.msra.mxu0 %v1582
        %1612 = vmatprep.subr.bf16.mxu0 0
        %1613 = vmatpush1.bf16.msra.mxu0 %v1581
        %1614 = vmatprep.subr.bf16.mxu0 0
        %1615 = vmatpush1.bf16.msra.mxu0 %v1580
        %1616 = vmatprep.subr.bf16.mxu0 0
        %1617 = vmatpush1.bf16.msra.mxu0 %v1579
        %1618 = vmatprep.subr.bf16.mxu0 0
        %1619 = vmatpush1.bf16.msra.mxu0 %v1578
        %1620 = vmatprep.subr.bf16.mxu0 0
        %1621 = vmatpush1.bf16.msra.mxu0 %v1577
        %1622 = vmatprep.subr.bf16.mxu0 0
        %1623 = vmatpush1.bf16.msra.mxu0 %v1576
        %1624 = vmatprep.subr.bf16.mxu0 0
        %1625 = vmatpush2.bf16.msra.mxu0 %v1591
        %1626 = vmatprep.subr.bf16.mxu0 0
        %1627 = vmatpush2.bf16.msra.mxu0 %v1590
        %1628 = vmatprep.subr.bf16.mxu0 0
        %1629 = vmatpush2.bf16.msra.mxu0 %v1589
        %1630 = vmatprep.subr.bf16.mxu0 0
        %1631 = vmatpush2.bf16.msra.mxu0 %v1588
        %1632 = vmatprep.subr.bf16.mxu0 0
        %1633 = vmatpush2.bf16.msra.mxu0 %v1587
        %1634 = vmatprep.subr.bf16.mxu0 0
        %1635 = vmatpush2.bf16.msra.mxu0 %v1586
        %1636 = vmatprep.subr.bf16.mxu0 0
        %1637 = vmatpush2.bf16.msra.mxu0 %v1585
        %1638 = vmatprep.subr.bf16.mxu0 0
        %1639 = vmatpush2.bf16.msra.mxu0 %v1584
        %1640 = vmatprep.mubr.bf16.mxu0 %v1481
        %1641 = vmatmul.mubr.bf16.gmra.mxu0 %v1480
        %v1642 = vpop.f32.mrf.mxu0
        %v1643 = vadd.f32 %v1430, %v1642
        %v1644 = vpop.f32.mrf.mxu0
        %v1645 = vpop.f32.mrf.mxu0
        %v1646 = vadd.f32 %v1430, %v1645
        %v1647 = vpop.f32.mrf.mxu0
        %1648 = vmatprep.mubr.bf16.mxu0 %v1483
        %1649 = vmatmul.mubr.bf16.gmra.mxu0 %v1482
        %v1650 = vpop.f32.mrf.mxu0
        %v1651 = vadd.f32 %v1430, %v1650
        %v1652 = vpop.f32.mrf.mxu0
        %v1653 = vpop.f32.mrf.mxu0
        %v1654 = vadd.f32 %v1430, %v1653
        %v1655 = vpop.f32.mrf.mxu0
        %1656 = vmatprep.mubr.bf16.mxu0 %v1485
        %1657 = vmatmul.mubr.bf16.gmra.mxu0 %v1484
        %v1658 = vpop.f32.mrf.mxu0
        %v1659 = vadd.f32 %v1430, %v1658
        %v1660 = vpop.f32.mrf.mxu0
        %v1661 = vpop.f32.mrf.mxu0
        %v1662 = vadd.f32 %v1430, %v1661
        %v1663 = vpop.f32.mrf.mxu0
        %1664 = vmatprep.mubr.bf16.mxu0 %v1487
        %1665 = vmatmul.mubr.bf16.gmra.mxu0 %v1486
        %v1666 = vpop.f32.mrf.mxu0
        %v1667 = vadd.f32 %v1430, %v1666
        %v1668 = vpop.f32.mrf.mxu0
        %v1669 = vpop.f32.mrf.mxu0
        %v1670 = vadd.f32 %v1430, %v1669
        %v1671 = vpop.f32.mrf.mxu0
        %1672 = vmatprep.mubr.bf16.mxu0 %v1489
        %1673 = vmatmul.mubr.bf16.gmra.mxu0 %v1488
        %v1674 = vpop.f32.mrf.mxu0
        %v1675 = vadd.f32 %v1430, %v1674
        %v1676 = vpop.f32.mrf.mxu0
        %v1677 = vpop.f32.mrf.mxu0
        %v1678 = vadd.f32 %v1430, %v1677
        %v1679 = vpop.f32.mrf.mxu0
        %1680 = vmatprep.mubr.bf16.mxu0 %v1491
        %1681 = vmatmul.mubr.bf16.gmra.mxu0 %v1490
        %v1682 = vpop.f32.mrf.mxu0
        %v1683 = vadd.f32 %v1430, %v1682
        %v1684 = vpop.f32.mrf.mxu0
        %v1685 = vpop.f32.mrf.mxu0
        %v1686 = vadd.f32 %v1430, %v1685
        %v1687 = vpop.f32.mrf.mxu0
        %1688 = vmatprep.mubr.bf16.mxu0 %v1493
        %1689 = vmatmul.mubr.bf16.gmra.mxu0 %v1492
        %v1690 = vpop.f32.mrf.mxu0
        %v1691 = vadd.f32 %v1430, %v1690
        %v1692 = vpop.f32.mrf.mxu0
        %v1693 = vpop.f32.mrf.mxu0
        %v1694 = vadd.f32 %v1430, %v1693
        %v1695 = vpop.f32.mrf.mxu0
        %1696 = vmatprep.mubr.bf16.mxu0 %v1495
        %1697 = vmatmul.mubr.bf16.gmra.mxu0 %v1494
        %v1698 = vpop.f32.mrf.mxu0
        %v1699 = vadd.f32 %v1430, %v1698
        %v1700 = vpop.f32.mrf.mxu0
        %v1701 = vpop.f32.mrf.mxu0
        %v1702 = vadd.f32 %v1430, %v1701
        %v1703 = vpop.f32.mrf.mxu0
        %1704 = vdwg.mxu0
        %v1705 = vmax.f32 %v1643, 0.0
        %v1706 = vmax.f32 %v1646, 0.0
        %v1707 = vmax.f32 %v1651, 0.0
        %v1708 = vmax.f32 %v1654, 0.0
        %v1709 = vmax.f32 %v1659, 0.0
        %v1710 = vmax.f32 %v1662, 0.0
        %v1711 = vmax.f32 %v1667, 0.0
        %v1712 = vmax.f32 %v1670, 0.0
        %v1713 = vmax.f32 %v1675, 0.0
        %v1714 = vmax.f32 %v1678, 0.0
        %v1715 = vmax.f32 %v1683, 0.0
        %v1716 = vmax.f32 %v1686, 0.0
        %v1717 = vmax.f32 %v1691, 0.0
        %v1718 = vmax.f32 %v1694, 0.0
        %v1719 = vmax.f32 %v1699, 0.0
        %v1720 = vmax.f32 %v1702, 0.0
        %v1721 = vpack.c.bf16 %v1706, %v1705
        %v1722 = vpack.c.bf16 %v1708, %v1707
        %v1723 = vpack.c.bf16 %v1710, %v1709
        %v1724 = vpack.c.bf16 %v1712, %v1711
        %v1725 = vpack.c.bf16 %v1714, %v1713
        %v1726 = vpack.c.bf16 %v1716, %v1715
        %v1727 = vpack.c.bf16 %v1718, %v1717
        %v1728 = vpack.c.bf16 %v1720, %v1719
        %s1729 = smul.addr %s685, 4
        %s1730 = scalar_lea.vmem [#allocation15], %s1729
        %v1731 = vld [vmem:[%s1730] sm:$0xf]
        %v1732 = vld [vmem:[%s1730 + $0x4] sm:$0xf]
        %v1733 = vld [vmem:[%s1730 + $0x8] sm:$0xf]
        %v1734 = vld [vmem:[%s1730 + $0xc] sm:$0xf]
        %v1735 = vld [vmem:[%s1730 + $0x10] sm:$0xf]
        %v1736 = vld [vmem:[%s1730 + $0x14] sm:$0xf]
        %v1737 = vld [vmem:[%s1730 + $0x18] sm:$0xf]
        %v1738 = vld [vmem:[%s1730 + $0x1c] sm:$0xf]
        %v1739 = vld [vmem:[%s1730 + $0x20] sm:$0xf]
        %v1740 = vld [vmem:[%s1730 + $0x24] sm:$0xf]
        %v1741 = vld [vmem:[%s1730 + $0x28] sm:$0xf]
        %v1742 = vld [vmem:[%s1730 + $0x2c] sm:$0xf]
        %v1743 = vld [vmem:[%s1730 + $0x30] sm:$0xf]
        %v1744 = vld [vmem:[%s1730 + $0x34] sm:$0xf]
        %v1745 = vld [vmem:[%s1730 + $0x38] sm:$0xf]
        %v1746 = vld [vmem:[%s1730 + $0x3c] sm:$0xf]
        %s1747 = scalar_lea.vmem %s10, %s27
        %v1748 = vld [vmem:[%s1747] sm:$0x1]
        %v1750 = vlaneseq
        %v1751 = vshrl.u32 %v1750, 7
        %v1752 = vsub.s32 0, %v1751
        %v1753 = vrot.slane %v1748, %v1752
        %v1771 = vunpack.c.l.b16 %v1731
        %v1772 = vunpack.c.l.b16 %v1732
        %v1773 = vunpack.c.l.b16 %v1733
        %v1774 = vunpack.c.l.b16 %v1734
        %v1775 = vunpack.c.l.b16 %v1735
        %v1776 = vunpack.c.l.b16 %v1736
        %v1777 = vunpack.c.l.b16 %v1737
        %v1778 = vunpack.c.l.b16 %v1738
        %v1779 = vunpack.c.l.b16 %v1739
        %v1780 = vunpack.c.l.b16 %v1740
        %v1781 = vunpack.c.l.b16 %v1741
        %v1782 = vunpack.c.l.b16 %v1742
        %v1783 = vunpack.c.l.b16 %v1743
        %v1784 = vunpack.c.l.b16 %v1744
        %v1785 = vunpack.c.l.b16 %v1745
        %v1786 = vunpack.c.l.b16 %v1746
        %v1787 = vpack.c.b16 %v1772, %v1771
        %v1788 = vpack.c.b16 %v1774, %v1773
        %v1789 = vpack.c.b16 %v1776, %v1775
        %v1790 = vpack.c.b16 %v1778, %v1777
        %v1791 = vpack.c.b16 %v1780, %v1779
        %v1792 = vpack.c.b16 %v1782, %v1781
        %v1793 = vpack.c.b16 %v1784, %v1783
        %v1794 = vpack.c.b16 %v1786, %v1785
        %1803 = vmatprep.subr.bf16.mxu0 0
        %1804 = vmatpush1.bf16.msra.mxu0 %v1794
        %1805 = vmatprep.subr.bf16.mxu0 0
        %1806 = vmatpush1.bf16.msra.mxu0 %v1793
        %1807 = vmatprep.subr.bf16.mxu0 0
        %1808 = vmatpush1.bf16.msra.mxu0 %v1792
        %1809 = vmatprep.subr.bf16.mxu0 0
        %1810 = vmatpush1.bf16.msra.mxu0 %v1791
        %1811 = vmatprep.subr.bf16.mxu0 0
        %1812 = vmatpush1.bf16.msra.mxu0 %v1790
        %1813 = vmatprep.subr.bf16.mxu0 0
        %1814 = vmatpush1.bf16.msra.mxu0 %v1789
        %1815 = vmatprep.subr.bf16.mxu0 0
        %1816 = vmatpush1.bf16.msra.mxu0 %v1788
        %1817 = vmatprep.subr.bf16.mxu0 0
        %1818 = vmatpush1.bf16.msra.mxu0 %v1787
        %1819 = vmatprep.subr.bf16.mxu0 0
        %1820 = vmatpush2.bf16.msra.mxu0 0
        %1821 = vmatprep.subr.bf16.mxu0 0
        %1822 = vmatpush2.bf16.msra.mxu0 0
        %1823 = vmatprep.subr.bf16.mxu0 0
        %1824 = vmatpush2.bf16.msra.mxu0 0
        %1825 = vmatprep.subr.bf16.mxu0 0
        %1826 = vmatpush2.bf16.msra.mxu0 0
        %1827 = vmatprep.subr.bf16.mxu0 0
        %1828 = vmatpush2.bf16.msra.mxu0 0
        %1829 = vmatprep.subr.bf16.mxu0 0
        %1830 = vmatpush2.bf16.msra.mxu0 0
        %1831 = vmatprep.subr.bf16.mxu0 0
        %1832 = vmatpush2.bf16.msra.mxu0 0
        %1833 = vmatprep.subr.bf16.mxu0 0
        %1834 = vmatpush2.bf16.msra.mxu0 0
        %1835 = vmatprep.mubr.bf16.mxu0 0
        %1836 = vmatmul.mubr.bf16.gmra.mxu0 %v1721
        %v1837 = vpop.f32.mrf.mxu0
        %v1838 = vadd.f32 %v1753, %v1837
        %v1839 = vpop.f32.mrf.mxu0
        %v1840 = vpop.f32.mrf.mxu0
        %v1841 = vadd.f32 %v1753, %v1840
        %v1842 = vpop.f32.mrf.mxu0
        %1843 = vmatprep.mubr.bf16.mxu0 0
        %1844 = vmatmul.mubr.bf16.gmra.mxu0 %v1722
        %v1845 = vpop.f32.mrf.mxu0
        %v1846 = vadd.f32 %v1753, %v1845
        %v1847 = vpop.f32.mrf.mxu0
        %v1848 = vpop.f32.mrf.mxu0
        %v1849 = vadd.f32 %v1753, %v1848
        %v1850 = vpop.f32.mrf.mxu0
        %1851 = vmatprep.mubr.bf16.mxu0 0
        %1852 = vmatmul.mubr.bf16.gmra.mxu0 %v1723
        %v1853 = vpop.f32.mrf.mxu0
        %v1854 = vadd.f32 %v1753, %v1853
        %v1855 = vpop.f32.mrf.mxu0
        %v1856 = vpop.f32.mrf.mxu0
        %v1857 = vadd.f32 %v1753, %v1856
        %v1858 = vpop.f32.mrf.mxu0
        %1859 = vmatprep.mubr.bf16.mxu0 0
        %1860 = vmatmul.mubr.bf16.gmra.mxu0 %v1724
        %v1861 = vpop.f32.mrf.mxu0
        %v1862 = vadd.f32 %v1753, %v1861
        %v1863 = vpop.f32.mrf.mxu0
        %v1864 = vpop.f32.mrf.mxu0
        %v1865 = vadd.f32 %v1753, %v1864
        %v1866 = vpop.f32.mrf.mxu0
        %1867 = vmatprep.mubr.bf16.mxu0 0
        %1868 = vmatmul.mubr.bf16.gmra.mxu0 %v1725
        %v1869 = vpop.f32.mrf.mxu0
        %v1870 = vadd.f32 %v1753, %v1869
        %v1871 = vpop.f32.mrf.mxu0
        %v1872 = vpop.f32.mrf.mxu0
        %v1873 = vadd.f32 %v1753, %v1872
        %v1874 = vpop.f32.mrf.mxu0
        %1875 = vmatprep.mubr.bf16.mxu0 0
        %1876 = vmatmul.mubr.bf16.gmra.mxu0 %v1726
        %v1877 = vpop.f32.mrf.mxu0
        %v1878 = vadd.f32 %v1753, %v1877
        %v1879 = vpop.f32.mrf.mxu0
        %v1880 = vpop.f32.mrf.mxu0
        %v1881 = vadd.f32 %v1753, %v1880
        %v1882 = vpop.f32.mrf.mxu0
        %1883 = vmatprep.mubr.bf16.mxu0 0
        %1884 = vmatmul.mubr.bf16.gmra.mxu0 %v1727
        %v1885 = vpop.f32.mrf.mxu0
        %v1886 = vadd.f32 %v1753, %v1885
        %v1887 = vpop.f32.mrf.mxu0
        %v1888 = vpop.f32.mrf.mxu0
        %v1889 = vadd.f32 %v1753, %v1888
        %v1890 = vpop.f32.mrf.mxu0
        %1891 = vmatprep.mubr.bf16.mxu0 0
        %1892 = vmatmul.mubr.bf16.gmra.mxu0 %v1728
        %v1893 = vpop.f32.mrf.mxu0
        %v1894 = vadd.f32 %v1753, %v1893
        %v1895 = vpop.f32.mrf.mxu0
        %v1896 = vpop.f32.mrf.mxu0
        %v1897 = vadd.f32 %v1753, %v1896
        %v1898 = vpop.f32.mrf.mxu0
        %1899 = vdwg.mxu0
        // Predicated region
        $region97: #{tpu_custom_call.1} parent=63 // pred_check
          %p1900 = pneg %p456
        $region98: #{tpu_custom_call.1} parent=63 // pred_check_branch
          %1902 = sbr.rel (%p1900) target = $region100
        $region99: #{tpu_custom_call.1} parent=63 // pred_region
          %1903 = vst [vmem:[#allocation2] sm:$0xff] %v1838
          %1904 = vst [vmem:[#allocation2 + $0x8] sm:$0xff] %v1841
          %1905 = vst [vmem:[#allocation2 + $0x10] sm:$0xff] %v1846
          %1906 = vst [vmem:[#allocation2 + $0x18] sm:$0xff] %v1849
          %1907 = vst [vmem:[#allocation2 + $0x20] sm:$0xff] %v1854
          %1908 = vst [vmem:[#allocation2 + $0x28] sm:$0xff] %v1857
          %1909 = vst [vmem:[#allocation2 + $0x30] sm:$0xff] %v1862
          %1910 = vst [vmem:[#allocation2 + $0x38] sm:$0xff] %v1865
          %1911 = vst [vmem:[#allocation2 + $0x40] sm:$0xff] %v1870
          %1912 = vst [vmem:[#allocation2 + $0x48] sm:$0xff] %v1873
          %1913 = vst [vmem:[#allocation2 + $0x50] sm:$0xff] %v1878
          %1914 = vst [vmem:[#allocation2 + $0x58] sm:$0xff] %v1881
          %1915 = vst [vmem:[#allocation2 + $0x60] sm:$0xff] %v1886
          %1916 = vst [vmem:[#allocation2 + $0x68] sm:$0xff] %v1889
          %1917 = vst [vmem:[#allocation2 + $0x70] sm:$0xff] %v1894
          %1918 = vst [vmem:[#allocation2 + $0x78] sm:$0xff] %v1897
        $region100: #{tpu_custom_call.1} parent=63 // pred_fallthru
          _
        %p1919 = scmp.gt.s32.totalorder %s27, 0
        %p1920 = scmp.lt.s32.totalorder %s27, 2
        %p1921 = pnand %p1919, %p1920
        %p1922 = pneg %p1921
        // Predicated region
        $region101: #{tpu_custom_call.1} parent=63 // pred_check
          _
        $region102: #{tpu_custom_call.1} parent=63 // pred_check_branch
          %1924 = sbr.rel (%p1921) target = $region104
        $region103: #{tpu_custom_call.1} parent=63 // pred_region
          %v1925 = vld [vmem:[#allocation2] sm:$0xff]
          %v1926 = vld [vmem:[#allocation2 + $0x8] sm:$0xff]
          %v1927 = vld [vmem:[#allocation2 + $0x10] sm:$0xff]
          %v1928 = vld [vmem:[#allocation2 + $0x18] sm:$0xff]
          %v1929 = vld [vmem:[#allocation2 + $0x20] sm:$0xff]
          %v1930 = vld [vmem:[#allocation2 + $0x28] sm:$0xff]
          %v1931 = vld [vmem:[#allocation2 + $0x30] sm:$0xff]
          %v1932 = vld [vmem:[#allocation2 + $0x38] sm:$0xff]
          %v1933 = vld [vmem:[#allocation2 + $0x40] sm:$0xff]
          %v1934 = vld [vmem:[#allocation2 + $0x48] sm:$0xff]
          %v1935 = vld [vmem:[#allocation2 + $0x50] sm:$0xff]
          %v1936 = vld [vmem:[#allocation2 + $0x58] sm:$0xff]
          %v1937 = vld [vmem:[#allocation2 + $0x60] sm:$0xff]
          %v1938 = vld [vmem:[#allocation2 + $0x68] sm:$0xff]
          %v1939 = vld [vmem:[#allocation2 + $0x70] sm:$0xff]
          %v1940 = vld [vmem:[#allocation2 + $0x78] sm:$0xff]
          %v1941 = vadd.f32 %v1838, %v1925
          %v1942 = vadd.f32 %v1841, %v1926
          %v1943 = vadd.f32 %v1846, %v1927
          %v1944 = vadd.f32 %v1849, %v1928
          %v1945 = vadd.f32 %v1854, %v1929
          %v1946 = vadd.f32 %v1857, %v1930
          %v1947 = vadd.f32 %v1862, %v1931
          %v1948 = vadd.f32 %v1865, %v1932
          %v1949 = vadd.f32 %v1870, %v1933
          %v1950 = vadd.f32 %v1873, %v1934
          %v1951 = vadd.f32 %v1878, %v1935
          %v1952 = vadd.f32 %v1881, %v1936
          %v1953 = vadd.f32 %v1886, %v1937
          %v1954 = vadd.f32 %v1889, %v1938
          %v1955 = vadd.f32 %v1894, %v1939
          %v1956 = vadd.f32 %v1897, %v1940
          %1957 = vst [vmem:[#allocation2] sm:$0xff] %v1941
          %1958 = vst [vmem:[#allocation2 + $0x8] sm:$0xff] %v1942
          %1959 = vst [vmem:[#allocation2 + $0x10] sm:$0xff] %v1943
          %1960 = vst [vmem:[#allocation2 + $0x18] sm:$0xff] %v1944
          %1961 = vst [vmem:[#allocation2 + $0x20] sm:$0xff] %v1945
          %1962 = vst [vmem:[#allocation2 + $0x28] sm:$0xff] %v1946
          %1963 = vst [vmem:[#allocation2 + $0x30] sm:$0xff] %v1947
          %1964 = vst [vmem:[#allocation2 + $0x38] sm:$0xff] %v1948
          %1965 = vst [vmem:[#allocation2 + $0x40] sm:$0xff] %v1949
          %1966 = vst [vmem:[#allocation2 + $0x48] sm:$0xff] %v1950
          %1967 = vst [vmem:[#allocation2 + $0x50] sm:$0xff] %v1951
          %1968 = vst [vmem:[#allocation2 + $0x58] sm:$0xff] %v1952
          %1969 = vst [vmem:[#allocation2 + $0x60] sm:$0xff] %v1953
          %1970 = vst [vmem:[#allocation2 + $0x68] sm:$0xff] %v1954
          %1971 = vst [vmem:[#allocation2 + $0x70] sm:$0xff] %v1955
          %1972 = vst [vmem:[#allocation2 + $0x78] sm:$0xff] %v1956
        $region104: #{tpu_custom_call.1} parent=63 // pred_fallthru
          _
        %p1973 = scmp.eq.s32.totalorder %s27, 2
        // Predicated region
        $region105: #{tpu_custom_call.1} parent=63 // pred_check
          %p1974 = pneg %p1973
        $region106: #{tpu_custom_call.1} parent=63 // pred_check_branch
          %1976 = sbr.rel (%p1974) target = $region108
        $region107: #{tpu_custom_call.1} parent=63 // pred_region
          %1977 = vst [vmem:[#allocation16] sm:$0xff] %v1838
          %1978 = vst [vmem:[#allocation16 + $0x8] sm:$0xff] %v1841
          %1979 = vst [vmem:[#allocation16 + $0x10] sm:$0xff] %v1846
          %1980 = vst [vmem:[#allocation16 + $0x18] sm:$0xff] %v1849
          %1981 = vst [vmem:[#allocation16 + $0x20] sm:$0xff] %v1854
          %1982 = vst [vmem:[#allocation16 + $0x28] sm:$0xff] %v1857
          %1983 = vst [vmem:[#allocation16 + $0x30] sm:$0xff] %v1862
          %1984 = vst [vmem:[#allocation16 + $0x38] sm:$0xff] %v1865
          %1985 = vst [vmem:[#allocation16 + $0x40] sm:$0xff] %v1870
          %1986 = vst [vmem:[#allocation16 + $0x48] sm:$0xff] %v1873
          %1987 = vst [vmem:[#allocation16 + $0x50] sm:$0xff] %v1878
          %1988 = vst [vmem:[#allocation16 + $0x58] sm:$0xff] %v1881
          %1989 = vst [vmem:[#allocation16 + $0x60] sm:$0xff] %v1886
          %1990 = vst [vmem:[#allocation16 + $0x68] sm:$0xff] %v1889
          %1991 = vst [vmem:[#allocation16 + $0x70] sm:$0xff] %v1894
          %1992 = vst [vmem:[#allocation16 + $0x78] sm:$0xff] %v1897
        $region108: #{tpu_custom_call.1} parent=63 // pred_fallthru
          _
        // Predicated region
        $region109: #{tpu_custom_call.1} parent=63 // pred_check
          %p1993 = pneg %p271
        $region110: #{tpu_custom_call.1} parent=63 // pred_check_branch
          %1995 = sbr.rel (%p1993) target = $region112
        $region111: #{tpu_custom_call.1} parent=63 // pred_region
          %s1997 = ssub.s32 2048, 2048
          %1998 = vsyncadd [#allocation6], %s1997
          %s1999 = sshll.u32 [#allocation16], 4
          %s2000 = int_to_ptr.vmem [resolvable:$true] %s1999
          %2005 = dma.vmem_to_hbm [thread:$0]  %s2000, 2048, %s11, [#allocation6], 128, 128, 8
        $region112: #{tpu_custom_call.1} parent=63 // pred_fallthru
          _
        // Predicated region
        $region113: #{tpu_custom_call.1} parent=63 // pred_check
          %p2006 = pneg %p271
        $region114: #{tpu_custom_call.1} parent=63 // pred_check_branch
          %2008 = sbr.rel (%p2006) target = $region116
        $region115: #{tpu_custom_call.1} parent=63 // pred_region
          %2009 = dma.done [#allocation6], 2048
        $region116: #{tpu_custom_call.1} parent=63 // pred_fallthru
          _
      $region64: #{tpu_custom_call.1} parent=5 // pred_fallthru
        _
      %p2010 = scmp.le.s32.totalorder 2, %s22
      // Predicated region
      $region117: #{tpu_custom_call.1} parent=5 // pred_check
        %p2011 = pneg %p2010
      $region118: #{tpu_custom_call.1} parent=5 // pred_check_branch
        %2013 = sbr.rel (%p2011) target = $region120
      $region119: #{tpu_custom_call.1} parent=5 // pred_region
        %s2014 = ssub.s32 %s22, 2
      $region120: #{tpu_custom_call.1} parent=5 // pred_fallthru
        _
    $region6: #{tpu_custom_call.1} parent=1 // loop_footer
      %s26 = sadd.s32 1, %s22
    $region7: #{tpu_custom_call.1} parent=1 // loop_footer_branch
      %21 = sbr.rel target = $region3
    $region8: #{tpu_custom_call.1} parent=1 // loop_exit
      _
    %2015 = vsyncpa [#allocation5], 1
    %s2016 = scalar_lea.sflag [#allocation5], 1
    %2017 = vsyncpa %s2016, 1
    %2018 = vsyncpa [#allocation8], 1
    %2019 = vsyncpa [#allocation11], 1
    %2020 = vsyncpa [#allocation14], 1
    %2021 = vsyncpa [#allocation6], 1
    %s2022 = scalar_lea.sflag [#allocation6], 1
    %2023 = vsyncpa %s2022, 1

</llo_original>
